<compile_context>
chip_gen: v6e
topology: v6e:2x2x1
jax: 0.10.0
libtpu: 0.0.40
codegen_flags: <defaults>
</compile_context>

<pallas_src>
import jax
import jax.numpy as jnp
from jax.experimental import pallas as pl
from jax.experimental.pallas import tpu as pltpu

LANE = 128      # vreg lane width
SUBLANE = 8     # vreg sublane count (f32)


def _round_up(x, m):
    return ((x + m - 1) // m) * m


def _cdiv(a, b):
    return -(-a // b)


# Single-buffer the grid-invariant weight/bias blocks (they are fetched once
# and never change block index).  Fall back gracefully if this jax build does
# not expose / accept pl.Buffered(1).
try:
    _WEIGHT_BUFFERING = pl.Buffered(1)
except Exception:                      # pragma: no cover
    _WEIGHT_BUFFERING = None


# ---------------------------------------------------------------------------
# Kernel: full 3-layer forward fused in one body.  Weights are resident
# full-array VMEM blocks; only the batch (rows of x / o) is tiled by the grid.
# ---------------------------------------------------------------------------
def actor_kernel(x_ref, w1_ref, b1_ref, w2_ref, b2_ref, w3_ref, b3_ref, o_ref):
    # Matmul operands take each weight's dtype (f32 or bf16, per layer);
    # accumulation (preferred_element_type) and the epilogues stay f32.
    x = x_ref[...]

    h1 = jnp.dot(x.astype(w1_ref.dtype), w1_ref[...],
                 preferred_element_type=jnp.float32) + b1_ref[...]
    h1 = jnp.maximum(h1, 0.0)                    # ReLU (VPU, f32)

    h2 = jnp.dot(h1.astype(w2_ref.dtype), w2_ref[...],
                 preferred_element_type=jnp.float32) + b2_ref[...]
    h2 = jnp.maximum(h2, 0.0)                    # ReLU

    y = jnp.dot(h2.astype(w3_ref.dtype), w3_ref[...],
                preferred_element_type=jnp.float32) + b3_ref[...]
    o_ref[...] = jnp.tanh(y)                     # tanh (EUP), lane-dense store


# ---------------------------------------------------------------------------
# Parameter handling
# ---------------------------------------------------------------------------
def init_linear(key, fan_in, fan_out):
    # PyTorch nn.Linear default init: U(-1/sqrt(fan_in), 1/sqrt(fan_in)).
    kw, kb = jax.random.split(key)
    bound = 1.0 / jnp.sqrt(jnp.float32(fan_in))
    # stored as (in, out) so the kernel computes x @ W directly
    w = jax.random.uniform(kw, (fan_in, fan_out), jnp.float32, -bound, bound)
    b = jax.random.uniform(kb, (1, fan_out), jnp.float32, -bound, bound)
    return w, b


def make_params(key, state_size, action_size, fc1_units=400, fc2_units=300):
    k1, k2, k3 = jax.random.split(key, 3)
    w1, b1 = init_linear(k1, state_size, fc1_units)
    w2, b2 = init_linear(k2, fc1_units, fc2_units)
    w3, b3 = init_linear(k3, fc2_units, action_size)
    return (w1, b1, w2, b2, w3, b3)


def prepare_params(params, matmul_dtype=jnp.bfloat16, fc1_matmul_dtype=None):
    """Zero-pad feature dims to lane multiples (once) and cast matmul operands.

    Padding is numerically exact: extra w1/b1 columns are zero so the extra h1
    units are ReLU(0)=0; the matching zero rows of w2 make them contribute
    nothing, and likewise for w2/b2 -> w3.  Extra output columns are tanh(0)
    and get sliced off in the wrapper.

    matmul_dtype: operand dtype for fc2/fc3 weights (and matching activation
      casts in the kernel).  Default bf16 = half the weight DMA + native MXU;
      pass jnp.float32 for bit-parity with the f32 reference.
    fc1_matmul_dtype: operand dtype for fc1 only (defaults to matmul_dtype).
      On v5e (no bf16 VPU) keep this f32 to skip the x cast on the tiny-K fc1.
    Biases always stay f32 (epilogue math stays f32).
    """
    if fc1_matmul_dtype is None:
        fc1_matmul_dtype = matmul_dtype
    w1, b1, w2, b2, w3, b3 = params
    S, H1 = w1.shape
    H2 = w2.shape[1]
    A = w3.shape[1]
    H1p = _round_up(H1, LANE)
    H2p = _round_up(H2, LANE)
    Ap = _round_up(max(A, LANE), LANE)

    def pad_w(w, rows, cols, dt):
        return jnp.pad(w, ((0, rows - w.shape[0]),
                           (0, cols - w.shape[1]))).astype(dt)

    def pad_b(b, cols):
        b = b.reshape(1, -1)
        return jnp.pad(b, ((0, 0), (0, cols - b.shape[1]))).astype(jnp.float32)

    padded = (pad_w(w1, S, H1p, fc1_matmul_dtype), pad_b(b1, H1p),
              pad_w(w2, H1p, H2p, matmul_dtype), pad_b(b2, H2p),
              pad_w(w3, H2p, Ap, matmul_dtype), pad_b(b3, Ap))
    return padded, A


# ---------------------------------------------------------------------------
# Batch tile selection (adaptive, per review)
# ---------------------------------------------------------------------------
def _choose_batch_tile(B, block_batch):
    """Cap tiles at block_batch, size them to the actual batch (minimal
    padding waste), and keep >=2 grid steps (>=4 for larger batches) so both
    v7x TensorCores get work and x/out DMA pipelines under MXU compute."""
    n_tiles = _cdiv(B, block_batch)
    if B >= 512:
        n_tiles = max(n_tiles, 4)
    elif B >= 128:
        n_tiles = max(n_tiles, 2)
    TB = _round_up(_cdiv(B, n_tiles), SUBLANE)
    B_pad = _round_up(B, TB)
    return TB, B_pad


# ---------------------------------------------------------------------------
# Wrapper: batch-tiled pallas_call
# ---------------------------------------------------------------------------
def actor_forward(x, padded_params, action_size, *, block_batch=2048):
    """x: (B, state_size) f32 -> (B, action_size) f32.

    block_batch=2048 keeps the per-tile live set (~11 MiB: f32 h1/h2 + double-
    buffered x/out + resident weights) comfortably under the 32 MiB default
    scoped VMEM on v5e/v6e and under v7x's 64 MiB physical VMEM.
    For the act() path (B ~ 1-8) the kernel is weight-DMA/launch bound: batch
    multiple agents/envs per call to amortize the weight fetch.
    """
    global _WEIGHT_BUFFERING
    w1, b1, w2, b2, w3, b3 = padded_params
    B, S = x.shape
    H1p, H2p, Ap = w1.shape[1], w2.shape[1], w3.shape[1]

    TB, B_pad = _choose_batch_tile(B, block_batch)
    xp = jnp.pad(x, ((0, B_pad - B), (0, 0))) if B_pad != B else x

    # Advisory hint so XLA schedules surrounding ops around the custom call.
    cost = pl.CostEstimate(
        flops=int(2 * B_pad * (S * H1p + H1p * H2p + H2p * Ap)),
        transcendentals=int(B_pad * Ap),
        bytes_accessed=int(B_pad * S * 4 + B_pad * Ap * 4
                           + sum(int(p.size) * p.dtype.itemsize
                                 for p in padded_params)),
    )

    def call(weight_mode):
        kw = {} if weight_mode is None else {"pipeline_mode": weight_mode}

        def wspec(shape):
            return pl.BlockSpec(shape, lambda i: (0, 0), **kw)

        return pl.pallas_call(
            actor_kernel,
            out_shape=jax.ShapeDtypeStruct((B_pad, Ap), jnp.float32),
            grid=(B_pad // TB,),
            in_specs=[
                pl.BlockSpec((TB, S), lambda i: (i, 0)),   # x   (batch-tiled)
                wspec((S, H1p)), wspec((1, H1p)),          # fc1 (resident)
                wspec((H1p, H2p)), wspec((1, H2p)),        # fc2 (resident)
                wspec((H2p, Ap)), wspec((1, Ap)),          # fc3 (resident)
            ],
            out_specs=pl.BlockSpec((TB, Ap), lambda i: (i, 0)),  # lane-dense
            compiler_params=pltpu.CompilerParams(
                dimension_semantics=("parallel",)),        # megacore on v7x
            cost_estimate=cost,
        )(xp, w1, b1, w2, b2, w3, b3)

    if _WEIGHT_BUFFERING is None:
        out = call(None)
    else:
        try:
            out = call(_WEIGHT_BUFFERING)
        except Exception:
            _WEIGHT_BUFFERING = None       # this jax build rejects Buffered(1)
            out = call(None)

    return out[:B, :action_size]


# ---------------------------------------------------------------------------
# Demo / correctness check
# ---------------------------------------------------------------------------
def _reference(state, params):
    w1, b1, w2, b2, w3, b3 = params
    h1 = jnp.maximum(state @ w1 + b1, 0.0)
    h2 = jnp.maximum(h1 @ w2 + b2, 0.0)
    return jnp.tanh(h2 @ w3 + b3)


if __name__ == "__main__":
    key = jax.random.PRNGKey(0)
    kp, kx1, kx2 = jax.random.split(key, 3)

    # Unity Tennis-like sizes: state_size=24, action_size=2.
    state_size, action_size = 24, 2
    params = make_params(kp, state_size, action_size)

    # f32 operand build: bit-parity with the reference (tight tolerance).
    padded_f32, act = prepare_params(params, matmul_dtype=jnp.float32)
    # bf16 operand build (the performance default).
    padded_bf16, _ = prepare_params(params)

    # 1) act()-style tiny batch: single grid step.
    state = jax.random.normal(kx1, (8, state_size), jnp.float32)
    out = jax.block_until_ready(actor_forward(state, padded_f32, act))
    ref = _reference(state, params)
    assert out.shape == (8, action_size)
    assert jnp.allclose(out, ref, atol=1e-5, rtol=1e-5)

    # 2) replay-buffer batch that is not a tile multiple: exercises the
    #    adaptive multi-step "parallel" batch grid (2 tiles of 104 rows).
    state2 = jax.random.normal(kx2, (200, state_size), jnp.float32)
    out2 = jax.block_until_ready(actor_forward(state2, padded_f32, act))
    ref2 = _reference(state2, params)
    assert out2.shape == (200, action_size)
    assert jnp.allclose(out2, ref2, atol=1e-5, rtol=1e-5)

    # 3) same batch through the default bf16 operand path (looser tolerance:
    #    bf16 operands are not bit-identical to the f32 reference).
    out3 = jax.block_until_ready(actor_forward(state2, padded_bf16, act))
    assert out3.shape == (200, action_size)
    assert jnp.allclose(out3, ref2, atol=5e-2, rtol=0.0)

    print("KERNEL_OK")
</pallas_src>

<mosaic_0001>
module attributes {stable_mosaic.version = 11 : i64} {
  func.func @actor_kernel(%arg0: i32, %arg1: memref<8x24xf32, #tpu.memory_space<vmem>>, %arg2: memref<24x512xf32, #tpu.memory_space<vmem>>, %arg3: memref<1x512xf32, #tpu.memory_space<vmem>>, %arg4: memref<512x384xf32, #tpu.memory_space<vmem>>, %arg5: memref<1x384xf32, #tpu.memory_space<vmem>>, %arg6: memref<384x128xf32, #tpu.memory_space<vmem>>, %arg7: memref<1x128xf32, #tpu.memory_space<vmem>>, %arg8: memref<8x128xf32, #tpu.memory_space<vmem>>) attributes {dimension_semantics = [#tpu.dimension_semantics<parallel>], iteration_bounds = array<i64: 1>, scalar_prefetch = 0 : i64, scratch_operands = 0 : i64, tpu.core_type = #tpu.core_type<tc>, window_params = [{transform_indices = @transform_0, window_bounds = array<i64: 8, 24>}, {pipeline_mode = #tpu.pipeline_mode<synchronous>, transform_indices = @transform_1, window_bounds = array<i64: 24, 512>}, {pipeline_mode = #tpu.pipeline_mode<synchronous>, transform_indices = @transform_2, window_bounds = array<i64: 1, 512>}, {pipeline_mode = #tpu.pipeline_mode<synchronous>, transform_indices = @transform_3, window_bounds = array<i64: 512, 384>}, {pipeline_mode = #tpu.pipeline_mode<synchronous>, transform_indices = @transform_4, window_bounds = array<i64: 1, 384>}, {pipeline_mode = #tpu.pipeline_mode<synchronous>, transform_indices = @transform_5, window_bounds = array<i64: 384, 128>}, {pipeline_mode = #tpu.pipeline_mode<synchronous>, transform_indices = @transform_6, window_bounds = array<i64: 1, 128>}, {transform_indices = @transform_7, window_bounds = array<i64: 8, 128>}]} {
    %c0 = arith.constant 0 : index
    %c0_0 = arith.constant 0 : index
    %0 = vector.load %arg1[%c0, %c0_0] : memref<8x24xf32, #tpu.memory_space<vmem>>, vector<8x24xf32>
    %c0_1 = arith.constant 0 : index
    %c0_2 = arith.constant 0 : index
    %1 = vector.load %arg2[%c0_1, %c0_2] : memref<24x512xf32, #tpu.memory_space<vmem>>, vector<24x512xf32>
    %cst = arith.constant dense<0.000000e+00> : vector<8x512xf32>
    %2 = tpu.matmul %0, %1, %cst {dimension_numbers = #tpu.dot_dimension_numbers<[1], [0], [0], [1], [0, 0, 1, 1], [], []>} : vector<8x24xf32>, vector<24x512xf32>, vector<8x512xf32> -> vector<8x512xf32>
    %c0_3 = arith.constant 0 : index
    %c0_4 = arith.constant 0 : index
    %3 = vector.load %arg3[%c0_3, %c0_4] : memref<1x512xf32, #tpu.memory_space<vmem>>, vector<1x512xf32>
    %4 = vector.broadcast %3 : vector<1x512xf32> to vector<8x512xf32>
    %5 = arith.addf %2, %4 : vector<8x512xf32>
    %cst_5 = arith.constant 0.000000e+00 : f32
    %6 = vector.broadcast %cst_5 : f32 to vector<8x512xf32>
    %7 = arith.maximumf %5, %6 : vector<8x512xf32>
    %c0_6 = arith.constant 0 : index
    %c0_7 = arith.constant 0 : index
    %8 = vector.load %arg4[%c0_6, %c0_7] : memref<512x384xf32, #tpu.memory_space<vmem>>, vector<512x384xf32>
    %cst_8 = arith.constant dense<0.000000e+00> : vector<8x384xf32>
    %9 = tpu.matmul %7, %8, %cst_8 {dimension_numbers = #tpu.dot_dimension_numbers<[1], [0], [0], [1], [0, 0, 1, 1], [], []>} : vector<8x512xf32>, vector<512x384xf32>, vector<8x384xf32> -> vector<8x384xf32>
    %c0_9 = arith.constant 0 : index
    %c0_10 = arith.constant 0 : index
    %10 = vector.load %arg5[%c0_9, %c0_10] : memref<1x384xf32, #tpu.memory_space<vmem>>, vector<1x384xf32>
    %11 = vector.broadcast %10 : vector<1x384xf32> to vector<8x384xf32>
    %12 = arith.addf %9, %11 : vector<8x384xf32>
    %cst_11 = arith.constant 0.000000e+00 : f32
    %13 = vector.broadcast %cst_11 : f32 to vector<8x384xf32>
    %14 = arith.maximumf %12, %13 : vector<8x384xf32>
    %c0_12 = arith.constant 0 : index
    %c0_13 = arith.constant 0 : index
    %15 = vector.load %arg6[%c0_12, %c0_13] : memref<384x128xf32, #tpu.memory_space<vmem>>, vector<384x128xf32>
    %cst_14 = arith.constant dense<0.000000e+00> : vector<8x128xf32>
    %16 = tpu.matmul %14, %15, %cst_14 {dimension_numbers = #tpu.dot_dimension_numbers<[1], [0], [0], [1], [0, 0, 1, 1], [], []>} : vector<8x384xf32>, vector<384x128xf32>, vector<8x128xf32> -> vector<8x128xf32>
    %c0_15 = arith.constant 0 : index
    %c0_16 = arith.constant 0 : index
    %17 = vector.load %arg7[%c0_15, %c0_16] : memref<1x128xf32, #tpu.memory_space<vmem>>, vector<1x128xf32>
    %18 = vector.broadcast %17 : vector<1x128xf32> to vector<8x128xf32>
    %19 = arith.addf %16, %18 : vector<8x128xf32>
    %20 = math.tanh %19 : vector<8x128xf32>
    %c0_17 = arith.constant 0 : index
    %c0_18 = arith.constant 0 : index
    %21 = vector.load %arg8[%c0_17, %c0_18] : memref<8x128xf32, #tpu.memory_space<vmem>>, vector<8x128xf32>
    tpu.vector_store %arg8[%c0_17, %c0_18], %20 {strides = array<i32>} : memref<8x128xf32, #tpu.memory_space<vmem>>, vector<8x128xf32>,
    return
  }
  func.func @transform_0(%arg0: i32) -> (i32, i32) {
    %c0_i32 = arith.constant 0 : i32
    %c0_i32_0 = arith.constant 0 : i32
    return %arg0, %c0_i32 : i32, i32
  }
  func.func @transform_1(%arg0: i32) -> (i32, i32) {
    %c0_i32 = arith.constant 0 : i32
    %c0_i32_0 = arith.constant 0 : i32
    %c0_i32_1 = arith.constant 0 : i32
    return %c0_i32, %c0_i32_0 : i32, i32
  }
  func.func @transform_2(%arg0: i32) -> (i32, i32) {
    %c0_i32 = arith.constant 0 : i32
    %c0_i32_0 = arith.constant 0 : i32
    %c0_i32_1 = arith.constant 0 : i32
    return %c0_i32, %c0_i32_0 : i32, i32
  }
  func.func @transform_3(%arg0: i32) -> (i32, i32) {
    %c0_i32 = arith.constant 0 : i32
    %c0_i32_0 = arith.constant 0 : i32
    %c0_i32_1 = arith.constant 0 : i32
    return %c0_i32, %c0_i32_0 : i32, i32
  }
  func.func @transform_4(%arg0: i32) -> (i32, i32) {
    %c0_i32 = arith.constant 0 : i32
    %c0_i32_0 = arith.constant 0 : i32
    %c0_i32_1 = arith.constant 0 : i32
    return %c0_i32, %c0_i32_0 : i32, i32
  }
  func.func @transform_5(%arg0: i32) -> (i32, i32) {
    %c0_i32 = arith.constant 0 : i32
    %c0_i32_0 = arith.constant 0 : i32
    %c0_i32_1 = arith.constant 0 : i32
    return %c0_i32, %c0_i32_0 : i32, i32
  }
  func.func @transform_6(%arg0: i32) -> (i32, i32) {
    %c0_i32 = arith.constant 0 : i32
    %c0_i32_0 = arith.constant 0 : i32
    %c0_i32_1 = arith.constant 0 : i32
    return %c0_i32, %c0_i32_0 : i32, i32
  }
  func.func @transform_7(%arg0: i32) -> (i32, i32) {
    %c0_i32 = arith.constant 0 : i32
    %c0_i32_0 = arith.constant 0 : i32
    return %arg0, %c0_i32 : i32, i32
  }
}

module attributes {stable_mosaic.version = 11 : i64} {
  func.func @actor_kernel(%arg0: i32, %arg1: memref<8x24xf32, #tpu.memory_space<vmem>>, %arg2: memref<24x512xf32, #tpu.memory_space<vmem>>, %arg3: memref<1x512xf32, #tpu.memory_space<vmem>>, %arg4: memref<512x384xf32, #tpu.memory_space<vmem>>, %arg5: memref<1x384xf32, #tpu.memory_space<vmem>>, %arg6: memref<384x128xf32, #tpu.memory_space<vmem>>, %arg7: memref<1x128xf32, #tpu.memory_space<vmem>>, %arg8: memref<8x128xf32, #tpu.memory_space<vmem>>) attributes {dimension_semantics = [#tpu.dimension_semantics<parallel>], iteration_bounds = array<i64: 1>, scalar_prefetch = 0 : i64, scratch_operands = 0 : i64, tpu.core_type = #tpu.core_type<tc>, window_params = [{transform_indices = @transform_0, window_bounds = array<i64: 8, 24>}, {pipeline_mode = #tpu.pipeline_mode<synchronous>, transform_indices = @transform_1, window_bounds = array<i64: 24, 512>}, {pipeline_mode = #tpu.pipeline_mode<synchronous>, transform_indices = @transform_2, window_bounds = array<i64: 1, 512>}, {pipeline_mode = #tpu.pipeline_mode<synchronous>, transform_indices = @transform_3, window_bounds = array<i64: 512, 384>}, {pipeline_mode = #tpu.pipeline_mode<synchronous>, transform_indices = @transform_4, window_bounds = array<i64: 1, 384>}, {pipeline_mode = #tpu.pipeline_mode<synchronous>, transform_indices = @transform_5, window_bounds = array<i64: 384, 128>}, {pipeline_mode = #tpu.pipeline_mode<synchronous>, transform_indices = @transform_6, window_bounds = array<i64: 1, 128>}, {transform_indices = @transform_7, window_bounds = array<i64: 8, 128>}]} {
    %c0 = arith.constant 0 : index
    %c0_0 = arith.constant 0 : index
    %0 = vector.load %arg1[%c0, %c0_0] : memref<8x24xf32, #tpu.memory_space<vmem>>, vector<8x24xf32>
    %c0_1 = arith.constant 0 : index
    %c0_2 = arith.constant 0 : index
    %1 = vector.load %arg2[%c0_1, %c0_2] : memref<24x512xf32, #tpu.memory_space<vmem>>, vector<24x512xf32>
    %cst = arith.constant dense<0.000000e+00> : vector<8x512xf32>
    %2 = tpu.matmul %0, %1, %cst {dimension_numbers = #tpu.dot_dimension_numbers<[1], [0], [0], [1], [0, 0, 1, 1], [], []>} : vector<8x24xf32>, vector<24x512xf32>, vector<8x512xf32> -> vector<8x512xf32>
    %c0_3 = arith.constant 0 : index
    %c0_4 = arith.constant 0 : index
    %3 = vector.load %arg3[%c0_3, %c0_4] : memref<1x512xf32, #tpu.memory_space<vmem>>, vector<1x512xf32>
    %4 = vector.broadcast %3 : vector<1x512xf32> to vector<8x512xf32>
    %5 = arith.addf %2, %4 : vector<8x512xf32>
    %cst_5 = arith.constant 0.000000e+00 : f32
    %6 = vector.broadcast %cst_5 : f32 to vector<8x512xf32>
    %7 = arith.maximumf %5, %6 : vector<8x512xf32>
    %c0_6 = arith.constant 0 : index
    %c0_7 = arith.constant 0 : index
    %8 = vector.load %arg4[%c0_6, %c0_7] : memref<512x384xf32, #tpu.memory_space<vmem>>, vector<512x384xf32>
    %cst_8 = arith.constant dense<0.000000e+00> : vector<8x384xf32>
    %9 = tpu.matmul %7, %8, %cst_8 {dimension_numbers = #tpu.dot_dimension_numbers<[1], [0], [0], [1], [0, 0, 1, 1], [], []>} : vector<8x512xf32>, vector<512x384xf32>, vector<8x384xf32> -> vector<8x384xf32>
    %c0_9 = arith.constant 0 : index
    %c0_10 = arith.constant 0 : index
    %10 = vector.load %arg5[%c0_9, %c0_10] : memref<1x384xf32, #tpu.memory_space<vmem>>, vector<1x384xf32>
    %11 = vector.broadcast %10 : vector<1x384xf32> to vector<8x384xf32>
    %12 = arith.addf %9, %11 : vector<8x384xf32>
    %cst_11 = arith.constant 0.000000e+00 : f32
    %13 = vector.broadcast %cst_11 : f32 to vector<8x384xf32>
    %14 = arith.maximumf %12, %13 : vector<8x384xf32>
    %c0_12 = arith.constant 0 : index
    %c0_13 = arith.constant 0 : index
    %15 = vector.load %arg6[%c0_12, %c0_13] : memref<384x128xf32, #tpu.memory_space<vmem>>, vector<384x128xf32>
    %cst_14 = arith.constant dense<0.000000e+00> : vector<8x128xf32>
    %16 = tpu.matmul %14, %15, %cst_14 {dimension_numbers = #tpu.dot_dimension_numbers<[1], [0], [0], [1], [0, 0, 1, 1], [], []>} : vector<8x384xf32>, vector<384x128xf32>, vector<8x128xf32> -> vector<8x128xf32>
    %c0_15 = arith.constant 0 : index
    %c0_16 = arith.constant 0 : index
    %17 = vector.load %arg7[%c0_15, %c0_16] : memref<1x128xf32, #tpu.memory_space<vmem>>, vector<1x128xf32>
    %18 = vector.broadcast %17 : vector<1x128xf32> to vector<8x128xf32>
    %19 = arith.addf %16, %18 : vector<8x128xf32>
    %20 = math.tanh %19 : vector<8x128xf32>
    %c0_17 = arith.constant 0 : index
    %c0_18 = arith.constant 0 : index
    %21 = vector.load %arg8[%c0_17, %c0_18] : memref<8x128xf32, #tpu.memory_space<vmem>>, vector<8x128xf32>
    tpu.vector_store %arg8[%c0_17, %c0_18], %20 {strides = array<i32>} : memref<8x128xf32, #tpu.memory_space<vmem>>, vector<8x128xf32>,
    return
  }
  func.func @transform_0(%arg0: i32) -> (i32, i32) {
    %c0_i32 = arith.constant 0 : i32
    %c0_i32_0 = arith.constant 0 : i32
    return %arg0, %c0_i32 : i32, i32
  }
  func.func @transform_1(%arg0: i32) -> (i32, i32) {
    %c0_i32 = arith.constant 0 : i32
    %c0_i32_0 = arith.constant 0 : i32
    %c0_i32_1 = arith.constant 0 : i32
    return %c0_i32, %c0_i32_0 : i32, i32
  }
  func.func @transform_2(%arg0: i32) -> (i32, i32) {
    %c0_i32 = arith.constant 0 : i32
    %c0_i32_0 = arith.constant 0 : i32
    %c0_i32_1 = arith.constant 0 : i32
    return %c0_i32, %c0_i32_0 : i32, i32
  }
  func.func @transform_3(%arg0: i32) -> (i32, i32) {
    %c0_i32 = arith.constant 0 : i32
    %c0_i32_0 = arith.constant 0 : i32
    %c0_i32_1 = arith.constant 0 : i32
    return %c0_i32, %c0_i32_0 : i32, i32
  }
  func.func @transform_4(%arg0: i32) -> (i32, i32) {
    %c0_i32 = arith.constant 0 : i32
    %c0_i32_0 = arith.constant 0 : i32
    %c0_i32_1 = arith.constant 0 : i32
    return %c0_i32, %c0_i32_0 : i32, i32
  }
  func.func @transform_5(%arg0: i32) -> (i32, i32) {
    %c0_i32 = arith.constant 0 : i32
    %c0_i32_0 = arith.constant 0 : i32
    %c0_i32_1 = arith.constant 0 : i32
    return %c0_i32, %c0_i32_0 : i32, i32
  }
  func.func @transform_6(%arg0: i32) -> (i32, i32) {
    %c0_i32 = arith.constant 0 : i32
    %c0_i32_0 = arith.constant 0 : i32
    %c0_i32_1 = arith.constant 0 : i32
    return %c0_i32, %c0_i32_0 : i32, i32
  }
  func.func @transform_7(%arg0: i32) -> (i32, i32) {
    %c0_i32 = arith.constant 0 : i32
    %c0_i32_0 = arith.constant 0 : i32
    return %arg0, %c0_i32 : i32, i32
  }
}

</mosaic_0001>

<llo_original>
// kernel: tpu_custom_call.1
$region0: #{tpu_custom_call.1}
  #allocation0 [shape = 'u32[]', space=smem, size = 0x4, offset = 0x4, fixed_abs, tag = 'smem constant byte address 0x4 - core index']
  #allocation1 [shape = 'u32[144,128]{1,0:T(1,128)}', space=vmem, size = 0x12000, scoped, tag = 'internal scratch']
  %s0 = inlined_call_operand.hbm [shape: f32[8,24], index: 0, kind: input, shape index: {}]
  %s1 = inlined_call_operand.hbm [shape: f32[24,512], index: 1, kind: input, shape index: {}]
  %s2 = inlined_call_operand.hbm [shape: f32[1,512], index: 2, kind: input, shape index: {}]
  %s3 = inlined_call_operand.hbm [shape: f32[512,384], index: 3, kind: input, shape index: {}]
  %s4 = inlined_call_operand.vmem [shape: f32[1,384], index: 4, kind: input, shape index: {}]
  %s5 = inlined_call_operand.hbm [shape: f32[384,128], index: 5, kind: input, shape index: {}]
  %s6 = inlined_call_operand.vmem [shape: f32[1,128], index: 6, kind: input, shape index: {}]
  %s7 = inlined_call_operand.hbm [shape: f32[8,128], index: 7, kind: output, shape index: {}]
  %s8 = sld [smem:[#allocation0]]
  $region58: #{tpu_custom_call.1} parent=0
    _
  %s10 = ssub.s32 1, %s8
  %s11 = scalar_select 0, %s10, %s8
  $region1: #{tpu_custom_call.1} parent=0
    #allocation2 [shape = 'u8[4096]{0}', space=vmem, size = 0x1000, scoped, tag = 'input window, operand 0, single buffered']
    #allocation3 [shape = 's32[1]{0}', space=sflag, size = 0x4, scoped, tag = 'scoped memory for tpu_custom_call.1']
    #allocation4 [shape = 's32[1]{0}', space=sflag, size = 0x4, scoped, tag = 'scoped memory for tpu_custom_call.1']
    #allocation5 [shape = 'u8[49152]{0}', space=vmem, size = 0xc000, scoped, tag = 'input window, operand 1, single buffered']
    #allocation6 [shape = 's32[1]{0}', space=sflag, size = 0x4, scoped, tag = 'scoped memory for tpu_custom_call.1']
    #allocation7 [shape = 'u8[2048]{0}', space=vmem, size = 0x800, scoped, tag = 'input window, operand 2, single buffered']
    #allocation8 [shape = 'u8[786432]{0}', space=vmem, size = 0xc0000, scoped, tag = 'input window, operand 3, single buffered']
    #allocation9 [shape = 's32[1]{0}', space=sflag, size = 0x4, scoped, tag = 'scoped memory for tpu_custom_call.1']
    #allocation10 [shape = 'u8[196608]{0}', space=vmem, size = 0x30000, scoped, tag = 'input window, operand 5, single buffered']
    #allocation11 [shape = 'u8[4096]{0}', space=vmem, size = 0x1000, scoped, tag = 'output window, operand 0, single buffered']
    %12 = vsyncpa [#allocation3], 0
    %13 = vsyncpa [#allocation6], 0
    %14 = vsyncpa [#allocation9], 0
    %15 = vsyncpa [#allocation4], 0
    // Predicated region
    $region2: #{tpu_custom_call.1} parent=1 // pred_check
      _
    $region3: #{tpu_custom_call.1} parent=1 // pred_check_branch
      %17 = sbr.rel (0) target = $region5
    $region4: #{tpu_custom_call.1} parent=1 // pred_region
      %s19 = ssub.s32 128, 128
      %20 = vsyncadd [#allocation3], %s19
      %s22 = sshll.u32 [#allocation2], 4
      %s23 = int_to_ptr.vmem [resolvable:$true] %s22
      %25 = dma.hbm_to_vmem [thread:$0]  %s0, 128, %s23, [#allocation3]
    $region5: #{tpu_custom_call.1} parent=1 // pred_fallthru
      _
    // Predicated region
    $region6: #{tpu_custom_call.1} parent=1 // pred_check
      _
    $region7: #{tpu_custom_call.1} parent=1 // pred_check_branch
      %27 = sbr.rel (0) target = $region9
    $region8: #{tpu_custom_call.1} parent=1 // pred_region
      %s29 = ssub.s32 1536, 1536
      %30 = vsyncadd [#allocation6], %s29
      %s31 = sshll.u32 [#allocation5], 4
      %s32 = int_to_ptr.vmem [resolvable:$true] %s31
      %37 = dma.hbm_to_vmem [thread:$0]  %s1, 1536, %s32, [#allocation6], 512, 512, 32
    $region9: #{tpu_custom_call.1} parent=1 // pred_fallthru
      _
    // Predicated region
    $region10: #{tpu_custom_call.1} parent=1 // pred_check
      _
    $region11: #{tpu_custom_call.1} parent=1 // pred_check_branch
      %39 = sbr.rel (0) target = $region13
    $region12: #{tpu_custom_call.1} parent=1 // pred_region
      %s41 = ssub.s32 64, 64
      %42 = vsyncadd [#allocation6], %s41
      %s44 = sshll.u32 [#allocation7], 4
      %s45 = int_to_ptr.vmem [resolvable:$true] %s44
      %47 = dma.hbm_to_vmem [thread:$0]  %s2, 64, %s45, [#allocation6]
    $region13: #{tpu_custom_call.1} parent=1 // pred_fallthru
      _
    // Predicated region
    $region14: #{tpu_custom_call.1} parent=1 // pred_check
      _
    $region15: #{tpu_custom_call.1} parent=1 // pred_check_branch
      %49 = sbr.rel (0) target = $region17
    $region16: #{tpu_custom_call.1} parent=1 // pred_region
      %s51 = ssub.s32 24576, 24576
      %52 = vsyncadd [#allocation9], %s51
      %s53 = sshll.u32 [#allocation8], 4
      %s54 = int_to_ptr.vmem [resolvable:$true] %s53
      %59 = dma.hbm_to_vmem [thread:$0]  %s3, 24576, %s54, [#allocation9], 384, 384, 24
    $region17: #{tpu_custom_call.1} parent=1 // pred_fallthru
      _
    // Predicated region
    $region18: #{tpu_custom_call.1} parent=1 // pred_check
      _
    $region19: #{tpu_custom_call.1} parent=1 // pred_check_branch
      %61 = sbr.rel (0) target = $region21
    $region20: #{tpu_custom_call.1} parent=1 // pred_region
      _
    $region21: #{tpu_custom_call.1} parent=1 // pred_fallthru
      _
    // Predicated region
    $region22: #{tpu_custom_call.1} parent=1 // pred_check
      _
    $region23: #{tpu_custom_call.1} parent=1 // pred_check_branch
      %63 = sbr.rel (0) target = $region25
    $region24: #{tpu_custom_call.1} parent=1 // pred_region
      %s65 = ssub.s32 6144, 6144
      %66 = vsyncadd [#allocation9], %s65
      %s67 = sshll.u32 [#allocation10], 4
      %s68 = int_to_ptr.vmem [resolvable:$true] %s67
      %73 = dma.hbm_to_vmem [thread:$0]  %s5, 6144, %s68, [#allocation9], 128, 128, 8
    $region25: #{tpu_custom_call.1} parent=1 // pred_fallthru
      _
    // Predicated region
    $region26: #{tpu_custom_call.1} parent=1 // pred_check
      _
    $region27: #{tpu_custom_call.1} parent=1 // pred_check_branch
      %75 = sbr.rel (0) target = $region29
    $region28: #{tpu_custom_call.1} parent=1 // pred_region
      _
    $region29: #{tpu_custom_call.1} parent=1 // pred_fallthru
      _
    // Predicated region
    $region30: #{tpu_custom_call.1} parent=1 // pred_check
      _
    $region31: #{tpu_custom_call.1} parent=1 // pred_check_branch
      %77 = sbr.rel (0) target = $region33
    $region32: #{tpu_custom_call.1} parent=1 // pred_region
      %78 = dma.done [#allocation3], 128
    $region33: #{tpu_custom_call.1} parent=1 // pred_fallthru
      _
    // Predicated region
    $region34: #{tpu_custom_call.1} parent=1 // pred_check
      _
    $region35: #{tpu_custom_call.1} parent=1 // pred_check_branch
      %80 = sbr.rel (0) target = $region37
    $region36: #{tpu_custom_call.1} parent=1 // pred_region
      %81 = dma.done [#allocation6], 1536
    $region37: #{tpu_custom_call.1} parent=1 // pred_fallthru
      _
    // Predicated region
    $region38: #{tpu_custom_call.1} parent=1 // pred_check
      _
    $region39: #{tpu_custom_call.1} parent=1 // pred_check_branch
      %83 = sbr.rel (0) target = $region41
    $region40: #{tpu_custom_call.1} parent=1 // pred_region
      %84 = dma.done [#allocation6], 64
    $region41: #{tpu_custom_call.1} parent=1 // pred_fallthru
      _
    // Predicated region
    $region42: #{tpu_custom_call.1} parent=1 // pred_check
      _
    $region43: #{tpu_custom_call.1} parent=1 // pred_check_branch
      %86 = sbr.rel (0) target = $region45
    $region44: #{tpu_custom_call.1} parent=1 // pred_region
      %87 = dma.done [#allocation9], 24576
    $region45: #{tpu_custom_call.1} parent=1 // pred_fallthru
      _
    // Predicated region
    $region46: #{tpu_custom_call.1} parent=1 // pred_check
      _
    $region47: #{tpu_custom_call.1} parent=1 // pred_check_branch
      %89 = sbr.rel (0) target = $region49
    $region48: #{tpu_custom_call.1} parent=1 // pred_region
      %90 = dma.done [#allocation9], 6144
    $region49: #{tpu_custom_call.1} parent=1 // pred_fallthru
      _
    %v91 = vld [vmem:[#allocation2] sm:$0xff]
    %v92 = vld [vmem:[#allocation5] sm:$0xff]
    %v93 = vld [vmem:[#allocation5 + $0x8] sm:$0xff]
    %v94 = vld [vmem:[#allocation5 + $0x10] sm:$0xff]
    %v95 = vld [vmem:[#allocation5 + $0x18] sm:$0xff]
    %v96 = vld [vmem:[#allocation5 + $0x20] sm:$0xff]
    %v97 = vld [vmem:[#allocation5 + $0x28] sm:$0xff]
    %v98 = vld [vmem:[#allocation5 + $0x30] sm:$0xff]
    %v99 = vld [vmem:[#allocation5 + $0x38] sm:$0xff]
    %v100 = vld [vmem:[#allocation5 + $0x40] sm:$0xff]
    %v101 = vld [vmem:[#allocation5 + $0x48] sm:$0xff]
    %v102 = vld [vmem:[#allocation5 + $0x50] sm:$0xff]
    %v103 = vld [vmem:[#allocation5 + $0x58] sm:$0xff]
    %v104 = vld [vmem:[#allocation7] sm:$0xf]
    %v106 = vlaneseq
    %v107 = vshrl.u32 %v106, 7
    %v108 = vsub.s32 0, %v107
    %v109 = vrot.slane %v104, %v108
    %v110 = vlaneseq
    %v111 = vshrl.u32 %v110, 7
    %v112 = vsub.s32 1, %v111
    %v113 = vrot.slane %v104, %v112
    %v114 = vlaneseq
    %v115 = vshrl.u32 %v114, 7
    %v116 = vsub.s32 2, %v115
    %v117 = vrot.slane %v104, %v116
    %v118 = vlaneseq
    %v119 = vshrl.u32 %v118, 7
    %v120 = vsub.s32 3, %v119
    %v121 = vrot.slane %v104, %v120
    %vm126 = vcmask 195584
    %v128 = vsel %vm126, %v91, 0
    %130 = vmatprep.subr.mxu0 0.0
    %131 = vmatpush1.msra.mxu0 0.0
    %132 = vmatprep.subr.mxu0 0.0
    %133 = vmatpush1.msra.mxu0 0.0
    %134 = vmatprep.subr.mxu0 0.0
    %135 = vmatpush1.msra.mxu0 0.0
    %136 = vmatprep.subr.mxu0 0.0
    %137 = vmatpush1.msra.mxu0 0.0
    %138 = vmatprep.subr.mxu0 0.0
    %139 = vmatpush1.msra.mxu0 0.0
    %140 = vmatprep.subr.mxu0 0.0
    %141 = vmatpush1.msra.mxu0 0.0
    %142 = vmatprep.subr.mxu0 0.0
    %143 = vmatpush1.msra.mxu0 0.0
    %144 = vmatprep.subr.mxu0 0.0
    %145 = vmatpush1.msra.mxu0 0.0
    %146 = vmatprep.subr.mxu0 0.0
    %147 = vmatpush1.msra.mxu0 0.0
    %148 = vmatprep.subr.mxu0 0.0
    %149 = vmatpush1.msra.mxu0 0.0
    %150 = vmatprep.subr.mxu0 0.0
    %151 = vmatpush1.msra.mxu0 0.0
    %152 = vmatprep.subr.mxu0 0.0
    %153 = vmatpush1.msra.mxu0 0.0
    %154 = vmatprep.subr.mxu0 0.0
    %155 = vmatpush1.msra.mxu0 0.0
    %156 = vmatprep.subr.mxu0 %v101
    %157 = vmatpush1.msra.mxu0 %v100
    %158 = vmatprep.subr.mxu0 %v97
    %159 = vmatpush1.msra.mxu0 %v96
    %160 = vmatprep.subr.mxu0 %v93
    %161 = vmatpush1.msra.mxu0 %v92
    %162 = vmatprep.subr.mxu0 0.0
    %163 = vmatpush2.msra.mxu0 0.0
    %164 = vmatprep.subr.mxu0 0.0
    %165 = vmatpush2.msra.mxu0 0.0
    %166 = vmatprep.subr.mxu0 0.0
    %167 = vmatpush2.msra.mxu0 0.0
    %168 = vmatprep.subr.mxu0 0.0
    %169 = vmatpush2.msra.mxu0 0.0
    %170 = vmatprep.subr.mxu0 0.0
    %171 = vmatpush2.msra.mxu0 0.0
    %172 = vmatprep.subr.mxu0 0.0
    %173 = vmatpush2.msra.mxu0 0.0
    %174 = vmatprep.subr.mxu0 0.0
    %175 = vmatpush2.msra.mxu0 0.0
    %176 = vmatprep.subr.mxu0 0.0
    %177 = vmatpush2.msra.mxu0 0.0
    %178 = vmatprep.subr.mxu0 0.0
    %179 = vmatpush2.msra.mxu0 0.0
    %180 = vmatprep.subr.mxu0 0.0
    %181 = vmatpush2.msra.mxu0 0.0
    %182 = vmatprep.subr.mxu0 0.0
    %183 = vmatpush2.msra.mxu0 0.0
    %184 = vmatprep.subr.mxu0 0.0
    %185 = vmatpush2.msra.mxu0 0.0
    %186 = vmatprep.subr.mxu0 0.0
    %187 = vmatpush2.msra.mxu0 0.0
    %188 = vmatprep.subr.mxu0 0.0
    %189 = vmatpush2.msra.mxu0 0.0
    %190 = vmatprep.subr.mxu0 0.0
    %191 = vmatpush2.msra.mxu0 0.0
    %192 = vmatprep.subr.mxu0 0.0
    %193 = vmatpush2.msra.mxu0 0.0
    %194 = vmatprep.mubr.f32.mxu0 0.0
    %195 = vmatmul.mubr.f32.gmra.mxu0 %v128
    %v196 = vpop.f32.mrf.mxu0
    %v197 = vadd.f32 %v109, %v196
    %v198 = vpop.f32.mrf.mxu0
    %v199 = vadd.f32 %v113, %v198
    %200 = vdwg.mxu0
    %201 = vmatprep.subr.mxu0 0.0
    %202 = vmatpush1.msra.mxu0 0.0
    %203 = vmatprep.subr.mxu0 0.0
    %204 = vmatpush1.msra.mxu0 0.0
    %205 = vmatprep.subr.mxu0 0.0
    %206 = vmatpush1.msra.mxu0 0.0
    %207 = vmatprep.subr.mxu0 0.0
    %208 = vmatpush1.msra.mxu0 0.0
    %209 = vmatprep.subr.mxu0 0.0
    %210 = vmatpush1.msra.mxu0 0.0
    %211 = vmatprep.subr.mxu0 0.0
    %212 = vmatpush1.msra.mxu0 0.0
    %213 = vmatprep.subr.mxu0 0.0
    %214 = vmatpush1.msra.mxu0 0.0
    %215 = vmatprep.subr.mxu0 0.0
    %216 = vmatpush1.msra.mxu0 0.0
    %217 = vmatprep.subr.mxu0 0.0
    %218 = vmatpush1.msra.mxu0 0.0
    %219 = vmatprep.subr.mxu0 0.0
    %220 = vmatpush1.msra.mxu0 0.0
    %221 = vmatprep.subr.mxu0 0.0
    %222 = vmatpush1.msra.mxu0 0.0
    %223 = vmatprep.subr.mxu0 0.0
    %224 = vmatpush1.msra.mxu0 0.0
    %225 = vmatprep.subr.mxu0 0.0
    %226 = vmatpush1.msra.mxu0 0.0
    %227 = vmatprep.subr.mxu0 %v103
    %228 = vmatpush1.msra.mxu0 %v102
    %229 = vmatprep.subr.mxu0 %v99
    %230 = vmatpush1.msra.mxu0 %v98
    %231 = vmatprep.subr.mxu0 %v95
    %232 = vmatpush1.msra.mxu0 %v94
    %233 = vmatprep.subr.mxu0 0.0
    %234 = vmatpush2.msra.mxu0 0.0
    %235 = vmatprep.subr.mxu0 0.0
    %236 = vmatpush2.msra.mxu0 0.0
    %237 = vmatprep.subr.mxu0 0.0
    %238 = vmatpush2.msra.mxu0 0.0
    %239 = vmatprep.subr.mxu0 0.0
    %240 = vmatpush2.msra.mxu0 0.0
    %241 = vmatprep.subr.mxu0 0.0
    %242 = vmatpush2.msra.mxu0 0.0
    %243 = vmatprep.subr.mxu0 0.0
    %244 = vmatpush2.msra.mxu0 0.0
    %245 = vmatprep.subr.mxu0 0.0
    %246 = vmatpush2.msra.mxu0 0.0
    %247 = vmatprep.subr.mxu0 0.0
    %248 = vmatpush2.msra.mxu0 0.0
    %249 = vmatprep.subr.mxu0 0.0
    %250 = vmatpush2.msra.mxu0 0.0
    %251 = vmatprep.subr.mxu0 0.0
    %252 = vmatpush2.msra.mxu0 0.0
    %253 = vmatprep.subr.mxu0 0.0
    %254 = vmatpush2.msra.mxu0 0.0
    %255 = vmatprep.subr.mxu0 0.0
    %256 = vmatpush2.msra.mxu0 0.0
    %257 = vmatprep.subr.mxu0 0.0
    %258 = vmatpush2.msra.mxu0 0.0
    %259 = vmatprep.subr.mxu0 0.0
    %260 = vmatpush2.msra.mxu0 0.0
    %261 = vmatprep.subr.mxu0 0.0
    %262 = vmatpush2.msra.mxu0 0.0
    %263 = vmatprep.subr.mxu0 0.0
    %264 = vmatpush2.msra.mxu0 0.0
    %265 = vmatprep.mubr.f32.mxu0 0.0
    %266 = vmatmul.mubr.f32.gmra.mxu0 %v128
    %v267 = vpop.f32.mrf.mxu0
    %v268 = vadd.f32 %v117, %v267
    %v269 = vpop.f32.mrf.mxu0
    %v270 = vadd.f32 %v121, %v269
    %271 = vdwg.mxu0
    %v272 = vmax.f32 %v197, 0.0
    %v273 = vmax.f32 %v199, 0.0
    %v274 = vmax.f32 %v268, 0.0
    %v275 = vmax.f32 %v270, 0.0
    %v276 = vld [vmem:[#allocation8] sm:$0xff]
    %v277 = vld [vmem:[#allocation8 + $0x8] sm:$0xff]
    %v278 = vld [vmem:[#allocation8 + $0x10] sm:$0xff]
    %v279 = vld [vmem:[#allocation8 + $0x18] sm:$0xff]
    %v280 = vld [vmem:[#allocation8 + $0x20] sm:$0xff]
    %v281 = vld [vmem:[#allocation8 + $0x28] sm:$0xff]
    %v282 = vld [vmem:[#allocation8 + $0x30] sm:$0xff]
    %v283 = vld [vmem:[#allocation8 + $0x38] sm:$0xff]
    %v284 = vld [vmem:[#allocation8 + $0x40] sm:$0xff]
    %v285 = vld [vmem:[#allocation8 + $0x48] sm:$0xff]
    %v286 = vld [vmem:[#allocation8 + $0x50] sm:$0xff]
    %v287 = vld [vmem:[#allocation8 + $0x58] sm:$0xff]
    %v288 = vld [vmem:[#allocation8 + $0x60] sm:$0xff]
    %v289 = vld [vmem:[#allocation8 + $0x68] sm:$0xff]
    %v290 = vld [vmem:[#allocation8 + $0x70] sm:$0xff]
    %v291 = vld [vmem:[#allocation8 + $0x78] sm:$0xff]
    %v292 = vld [vmem:[#allocation8 + $0x80] sm:$0xff]
    %v293 = vld [vmem:[#allocation8 + $0x88] sm:$0xff]
    %v294 = vld [vmem:[#allocation8 + $0x90] sm:$0xff]
    %v295 = vld [vmem:[#allocation8 + $0x98] sm:$0xff]
    %v296 = vld [vmem:[#allocation8 + $0xa0] sm:$0xff]
    %v297 = vld [vmem:[#allocation8 + $0xa8] sm:$0xff]
    %v298 = vld [vmem:[#allocation8 + $0xb0] sm:$0xff]
    %v299 = vld [vmem:[#allocation8 + $0xb8] sm:$0xff]
    %v300 = vld [vmem:[#allocation8 + $0xc0] sm:$0xff]
    %v301 = vld [vmem:[#allocation8 + $0xc8] sm:$0xff]
    %v302 = vld [vmem:[#allocation8 + $0xd0] sm:$0xff]
    %v303 = vld [vmem:[#allocation8 + $0xd8] sm:$0xff]
    %v304 = vld [vmem:[#allocation8 + $0xe0] sm:$0xff]
    %v305 = vld [vmem:[#allocation8 + $0xe8] sm:$0xff]
    %v306 = vld [vmem:[#allocation8 + $0xf0] sm:$0xff]
    %v307 = vld [vmem:[#allocation8 + $0xf8] sm:$0xff]
    %v308 = vld [vmem:[#allocation8 + $0x100] sm:$0xff]
    %v309 = vld [vmem:[#allocation8 + $0x108] sm:$0xff]
    %v310 = vld [vmem:[#allocation8 + $0x110] sm:$0xff]
    %v311 = vld [vmem:[#allocation8 + $0x118] sm:$0xff]
    %v312 = vld [vmem:[#allocation8 + $0x120] sm:$0xff]
    %v313 = vld [vmem:[#allocation8 + $0x128] sm:$0xff]
    %v314 = vld [vmem:[#allocation8 + $0x130] sm:$0xff]
    %v315 = vld [vmem:[#allocation8 + $0x138] sm:$0xff]
    %v316 = vld [vmem:[#allocation8 + $0x140] sm:$0xff]
    %v317 = vld [vmem:[#allocation8 + $0x148] sm:$0xff]
    %v318 = vld [vmem:[#allocation8 + $0x150] sm:$0xff]
    %v319 = vld [vmem:[#allocation8 + $0x158] sm:$0xff]
    %v320 = vld [vmem:[#allocation8 + $0x160] sm:$0xff]
    %v321 = vld [vmem:[#allocation8 + $0x168] sm:$0xff]
    %v322 = vld [vmem:[#allocation8 + $0x170] sm:$0xff]
    %v323 = vld [vmem:[#allocation8 + $0x178] sm:$0xff]
    %v324 = vld [vmem:[#allocation8 + $0x180] sm:$0xff]
    %v325 = vld [vmem:[#allocation8 + $0x188] sm:$0xff]
    %v326 = vld [vmem:[#allocation8 + $0x190] sm:$0xff]
    %v327 = vld [vmem:[#allocation8 + $0x198] sm:$0xff]
    %v328 = vld [vmem:[#allocation8 + $0x1a0] sm:$0xff]
    %v329 = vld [vmem:[#allocation8 + $0x1a8] sm:$0xff]
    %v330 = vld [vmem:[#allocation8 + $0x1b0] sm:$0xff]
    %v331 = vld [vmem:[#allocation8 + $0x1b8] sm:$0xff]
    %v332 = vld [vmem:[#allocation8 + $0x1c0] sm:$0xff]
    %v333 = vld [vmem:[#allocation8 + $0x1c8] sm:$0xff]
    %v334 = vld [vmem:[#allocation8 + $0x1d0] sm:$0xff]
    %v335 = vld [vmem:[#allocation8 + $0x1d8] sm:$0xff]
    %v336 = vld [vmem:[#allocation8 + $0x1e0] sm:$0xff]
    %v337 = vld [vmem:[#allocation8 + $0x1e8] sm:$0xff]
    %v338 = vld [vmem:[#allocation8 + $0x1f0] sm:$0xff]
    %v339 = vld [vmem:[#allocation8 + $0x1f8] sm:$0xff]
    %v340 = vld [vmem:[#allocation8 + $0x200] sm:$0xff]
    %v341 = vld [vmem:[#allocation8 + $0x208] sm:$0xff]
    %v342 = vld [vmem:[#allocation8 + $0x210] sm:$0xff]
    %v343 = vld [vmem:[#allocation8 + $0x218] sm:$0xff]
    %v344 = vld [vmem:[#allocation8 + $0x220] sm:$0xff]
    %v345 = vld [vmem:[#allocation8 + $0x228] sm:$0xff]
    %v346 = vld [vmem:[#allocation8 + $0x230] sm:$0xff]
    %v347 = vld [vmem:[#allocation8 + $0x238] sm:$0xff]
    %v348 = vld [vmem:[#allocation8 + $0x240] sm:$0xff]
    %v349 = vld [vmem:[#allocation8 + $0x248] sm:$0xff]
    %v350 = vld [vmem:[#allocation8 + $0x250] sm:$0xff]
    %v351 = vld [vmem:[#allocation8 + $0x258] sm:$0xff]
    %v352 = vld [vmem:[#allocation8 + $0x260] sm:$0xff]
    %v353 = vld [vmem:[#allocation8 + $0x268] sm:$0xff]
    %v354 = vld [vmem:[#allocation8 + $0x270] sm:$0xff]
    %v355 = vld [vmem:[#allocation8 + $0x278] sm:$0xff]
    %v356 = vld [vmem:[#allocation8 + $0x280] sm:$0xff]
    %v357 = vld [vmem:[#allocation8 + $0x288] sm:$0xff]
    %v358 = vld [vmem:[#allocation8 + $0x290] sm:$0xff]
    %v359 = vld [vmem:[#allocation8 + $0x298] sm:$0xff]
    %v360 = vld [vmem:[#allocation8 + $0x2a0] sm:$0xff]
    %v361 = vld [vmem:[#allocation8 + $0x2a8] sm:$0xff]
    %v362 = vld [vmem:[#allocation8 + $0x2b0] sm:$0xff]
    %v363 = vld [vmem:[#allocation8 + $0x2b8] sm:$0xff]
    %v364 = vld [vmem:[#allocation8 + $0x2c0] sm:$0xff]
    %v365 = vld [vmem:[#allocation8 + $0x2c8] sm:$0xff]
    %v366 = vld [vmem:[#allocation8 + $0x2d0] sm:$0xff]
    %v367 = vld [vmem:[#allocation8 + $0x2d8] sm:$0xff]
    %v368 = vld [vmem:[#allocation8 + $0x2e0] sm:$0xff]
    %v369 = vld [vmem:[#allocation8 + $0x2e8] sm:$0xff]
    %v370 = vld [vmem:[#allocation8 + $0x2f0] sm:$0xff]
    %v371 = vld [vmem:[#allocation8 + $0x2f8] sm:$0xff]
    %v372 = vld [vmem:[#allocation8 + $0x300] sm:$0xff]
    %v373 = vld [vmem:[#allocation8 + $0x308] sm:$0xff]
    %v374 = vld [vmem:[#allocation8 + $0x310] sm:$0xff]
    %v375 = vld [vmem:[#allocation8 + $0x318] sm:$0xff]
    %v376 = vld [vmem:[#allocation8 + $0x320] sm:$0xff]
    %v377 = vld [vmem:[#allocation8 + $0x328] sm:$0xff]
    %v378 = vld [vmem:[#allocation8 + $0x330] sm:$0xff]
    %v379 = vld [vmem:[#allocation8 + $0x338] sm:$0xff]
    %v380 = vld [vmem:[#allocation8 + $0x340] sm:$0xff]
    %v381 = vld [vmem:[#allocation8 + $0x348] sm:$0xff]
    %v382 = vld [vmem:[#allocation8 + $0x350] sm:$0xff]
    %v383 = vld [vmem:[#allocation8 + $0x358] sm:$0xff]
    %v384 = vld [vmem:[#allocation8 + $0x360] sm:$0xff]
    %v385 = vld [vmem:[#allocation8 + $0x368] sm:$0xff]
    %v386 = vld [vmem:[#allocation8 + $0x370] sm:$0xff]
    %v387 = vld [vmem:[#allocation8 + $0x378] sm:$0xff]
    %v388 = vld [vmem:[#allocation8 + $0x380] sm:$0xff]
    %v389 = vld [vmem:[#allocation8 + $0x388] sm:$0xff]
    %v390 = vld [vmem:[#allocation8 + $0x390] sm:$0xff]
    %v391 = vld [vmem:[#allocation8 + $0x398] sm:$0xff]
    %v392 = vld [vmem:[#allocation8 + $0x3a0] sm:$0xff]
    %v393 = vld [vmem:[#allocation8 + $0x3a8] sm:$0xff]
    %v394 = vld [vmem:[#allocation8 + $0x3b0] sm:$0xff]
    %v395 = vld [vmem:[#allocation8 + $0x3b8] sm:$0xff]
    %v396 = vld [vmem:[#allocation8 + $0x3c0] sm:$0xff]
    %v397 = vld [vmem:[#allocation8 + $0x3c8] sm:$0xff]
    %v398 = vld [vmem:[#allocation8 + $0x3d0] sm:$0xff]
    %v399 = vld [vmem:[#allocation8 + $0x3d8] sm:$0xff]
    %v400 = vld [vmem:[#allocation8 + $0x3e0] sm:$0xff]
    %v401 = vld [vmem:[#allocation8 + $0x3e8] sm:$0xff]
    %v402 = vld [vmem:[#allocation8 + $0x3f0] sm:$0xff]
    %v403 = vld [vmem:[#allocation8 + $0x3f8] sm:$0xff]
    %v404 = vld [vmem:[#allocation8 + $0x400] sm:$0xff]
    %v405 = vld [vmem:[#allocation8 + $0x408] sm:$0xff]
    %v406 = vld [vmem:[#allocation8 + $0x410] sm:$0xff]
    %v407 = vld [vmem:[#allocation8 + $0x418] sm:$0xff]
    %v408 = vld [vmem:[#allocation8 + $0x420] sm:$0xff]
    %v409 = vld [vmem:[#allocation8 + $0x428] sm:$0xff]
    %v410 = vld [vmem:[#allocation8 + $0x430] sm:$0xff]
    %v411 = vld [vmem:[#allocation8 + $0x438] sm:$0xff]
    %v412 = vld [vmem:[#allocation8 + $0x440] sm:$0xff]
    %v413 = vld [vmem:[#allocation8 + $0x448] sm:$0xff]
    %v414 = vld [vmem:[#allocation8 + $0x450] sm:$0xff]
    %v415 = vld [vmem:[#allocation8 + $0x458] sm:$0xff]
    %v416 = vld [vmem:[#allocation8 + $0x460] sm:$0xff]
    %v417 = vld [vmem:[#allocation8 + $0x468] sm:$0xff]
    %v418 = vld [vmem:[#allocation8 + $0x470] sm:$0xff]
    %v419 = vld [vmem:[#allocation8 + $0x478] sm:$0xff]
    %v420 = vld [vmem:[#allocation8 + $0x480] sm:$0xff]
    %v421 = vld [vmem:[#allocation8 + $0x488] sm:$0xff]
    %v422 = vld [vmem:[#allocation8 + $0x490] sm:$0xff]
    %v423 = vld [vmem:[#allocation8 + $0x498] sm:$0xff]
    %v424 = vld [vmem:[#allocation8 + $0x4a0] sm:$0xff]
    %v425 = vld [vmem:[#allocation8 + $0x4a8] sm:$0xff]
    %v426 = vld [vmem:[#allocation8 + $0x4b0] sm:$0xff]
    %v427 = vld [vmem:[#allocation8 + $0x4b8] sm:$0xff]
    %v428 = vld [vmem:[#allocation8 + $0x4c0] sm:$0xff]
    %v429 = vld [vmem:[#allocation8 + $0x4c8] sm:$0xff]
    %v430 = vld [vmem:[#allocation8 + $0x4d0] sm:$0xff]
    %v431 = vld [vmem:[#allocation8 + $0x4d8] sm:$0xff]
    %v432 = vld [vmem:[#allocation8 + $0x4e0] sm:$0xff]
    %v433 = vld [vmem:[#allocation8 + $0x4e8] sm:$0xff]
    %v434 = vld [vmem:[#allocation8 + $0x4f0] sm:$0xff]
    %v435 = vld [vmem:[#allocation8 + $0x4f8] sm:$0xff]
    %v436 = vld [vmem:[#allocation8 + $0x500] sm:$0xff]
    %v437 = vld [vmem:[#allocation8 + $0x508] sm:$0xff]
    %v438 = vld [vmem:[#allocation8 + $0x510] sm:$0xff]
    %v439 = vld [vmem:[#allocation8 + $0x518] sm:$0xff]
    %v440 = vld [vmem:[#allocation8 + $0x520] sm:$0xff]
    %v441 = vld [vmem:[#allocation8 + $0x528] sm:$0xff]
    %v442 = vld [vmem:[#allocation8 + $0x530] sm:$0xff]
    %v443 = vld [vmem:[#allocation8 + $0x538] sm:$0xff]
    %v444 = vld [vmem:[#allocation8 + $0x540] sm:$0xff]
    %v445 = vld [vmem:[#allocation8 + $0x548] sm:$0xff]
    %v446 = vld [vmem:[#allocation8 + $0x550] sm:$0xff]
    %v447 = vld [vmem:[#allocation8 + $0x558] sm:$0xff]
    %v448 = vld [vmem:[#allocation8 + $0x560] sm:$0xff]
    %v449 = vld [vmem:[#allocation8 + $0x568] sm:$0xff]
    %v450 = vld [vmem:[#allocation8 + $0x570] sm:$0xff]
    %v451 = vld [vmem:[#allocation8 + $0x578] sm:$0xff]
    %v452 = vld [vmem:[#allocation8 + $0x580] sm:$0xff]
    %v453 = vld [vmem:[#allocation8 + $0x588] sm:$0xff]
    %v454 = vld [vmem:[#allocation8 + $0x590] sm:$0xff]
    %v455 = vld [vmem:[#allocation8 + $0x598] sm:$0xff]
    %v456 = vld [vmem:[#allocation8 + $0x5a0] sm:$0xff]
    %v457 = vld [vmem:[#allocation8 + $0x5a8] sm:$0xff]
    %v458 = vld [vmem:[#allocation8 + $0x5b0] sm:$0xff]
    %v459 = vld [vmem:[#allocation8 + $0x5b8] sm:$0xff]
    %v460 = vld [vmem:[#allocation8 + $0x5c0] sm:$0xff]
    %v461 = vld [vmem:[#allocation8 + $0x5c8] sm:$0xff]
    %v462 = vld [vmem:[#allocation8 + $0x5d0] sm:$0xff]
    %v463 = vld [vmem:[#allocation8 + $0x5d8] sm:$0xff]
    %v464 = vld [vmem:[#allocation8 + $0x5e0] sm:$0xff]
    %v465 = vld [vmem:[#allocation8 + $0x5e8] sm:$0xff]
    %v466 = vld [vmem:[#allocation8 + $0x5f0] sm:$0xff]
    %v467 = vld [vmem:[#allocation8 + $0x5f8] sm:$0xff]
    %v468 = vld [vmem:[%s4] sm:$0x7]
    %v470 = vlaneseq
    %v471 = vshrl.u32 %v470, 7
    %v472 = vsub.s32 0, %v471
    %v473 = vrot.slane %v468, %v472
    %v474 = vlaneseq
    %v475 = vshrl.u32 %v474, 7
    %v476 = vsub.s32 1, %v475
    %v477 = vrot.slane %v468, %v476
    %v478 = vlaneseq
    %v479 = vshrl.u32 %v478, 7
    %v480 = vsub.s32 2, %v479
    %v481 = vrot.slane %v468, %v480
    %485 = vmatprep.subr.mxu0 %v322
    %486 = vmatpush1.msra.mxu0 %v321
    %487 = vmatprep.subr.mxu0 %v319
    %488 = vmatpush1.msra.mxu0 %v318
    %489 = vmatprep.subr.mxu0 %v316
    %490 = vmatpush1.msra.mxu0 %v315
    %491 = vmatprep.subr.mxu0 %v313
    %492 = vmatpush1.msra.mxu0 %v312
    %493 = vmatprep.subr.mxu0 %v310
    %494 = vmatpush1.msra.mxu0 %v309
    %495 = vmatprep.subr.mxu0 %v307
    %496 = vmatpush1.msra.mxu0 %v306
    %497 = vmatprep.subr.mxu0 %v304
    %498 = vmatpush1.msra.mxu0 %v303
    %499 = vmatprep.subr.mxu0 %v301
    %500 = vmatpush1.msra.mxu0 %v300
    %501 = vmatprep.subr.mxu0 %v298
    %502 = vmatpush1.msra.mxu0 %v297
    %503 = vmatprep.subr.mxu0 %v295
    %504 = vmatpush1.msra.mxu0 %v294
    %505 = vmatprep.subr.mxu0 %v292
    %506 = vmatpush1.msra.mxu0 %v291
    %507 = vmatprep.subr.mxu0 %v289
    %508 = vmatpush1.msra.mxu0 %v288
    %509 = vmatprep.subr.mxu0 %v286
    %510 = vmatpush1.msra.mxu0 %v285
    %511 = vmatprep.subr.mxu0 %v283
    %512 = vmatpush1.msra.mxu0 %v282
    %513 = vmatprep.subr.mxu0 %v280
    %514 = vmatpush1.msra.mxu0 %v279
    %515 = vmatprep.subr.mxu0 %v277
    %516 = vmatpush1.msra.mxu0 %v276
    %517 = vmatprep.subr.mxu0 %v370
    %518 = vmatpush2.msra.mxu0 %v369
    %519 = vmatprep.subr.mxu0 %v367
    %520 = vmatpush2.msra.mxu0 %v366
    %521 = vmatprep.subr.mxu0 %v364
    %522 = vmatpush2.msra.mxu0 %v363
    %523 = vmatprep.subr.mxu0 %v361
    %524 = vmatpush2.msra.mxu0 %v360
    %525 = vmatprep.subr.mxu0 %v358
    %526 = vmatpush2.msra.mxu0 %v357
    %527 = vmatprep.subr.mxu0 %v355
    %528 = vmatpush2.msra.mxu0 %v354
    %529 = vmatprep.subr.mxu0 %v352
    %530 = vmatpush2.msra.mxu0 %v351
    %531 = vmatprep.subr.mxu0 %v349
    %532 = vmatpush2.msra.mxu0 %v348
    %533 = vmatprep.subr.mxu0 %v346
    %534 = vmatpush2.msra.mxu0 %v345
    %535 = vmatprep.subr.mxu0 %v343
    %536 = vmatpush2.msra.mxu0 %v342
    %537 = vmatprep.subr.mxu0 %v340
    %538 = vmatpush2.msra.mxu0 %v339
    %539 = vmatprep.subr.mxu0 %v337
    %540 = vmatpush2.msra.mxu0 %v336
    %541 = vmatprep.subr.mxu0 %v334
    %542 = vmatpush2.msra.mxu0 %v333
    %543 = vmatprep.subr.mxu0 %v331
    %544 = vmatpush2.msra.mxu0 %v330
    %545 = vmatprep.subr.mxu0 %v328
    %546 = vmatpush2.msra.mxu0 %v327
    %547 = vmatprep.subr.mxu0 %v325
    %548 = vmatpush2.msra.mxu0 %v324
    %549 = vmatprep.mubr.f32.mxu0 %v273
    %550 = vmatmul.mubr.f32.gmra.mxu0 %v272
    %v551 = vpop.f32.mrf.mxu0
    %v552 = vadd.f32 %v473, %v551
    %v553 = vpop.f32.mrf.mxu0
    %v554 = vadd.f32 %v477, %v553
    %555 = vdwg.mxu0
    %556 = vmatprep.subr.mxu0 %v418
    %557 = vmatpush1.msra.mxu0 %v417
    %558 = vmatprep.subr.mxu0 %v415
    %559 = vmatpush1.msra.mxu0 %v414
    %560 = vmatprep.subr.mxu0 %v412
    %561 = vmatpush1.msra.mxu0 %v411
    %562 = vmatprep.subr.mxu0 %v409
    %563 = vmatpush1.msra.mxu0 %v408
    %564 = vmatprep.subr.mxu0 %v406
    %565 = vmatpush1.msra.mxu0 %v405
    %566 = vmatprep.subr.mxu0 %v403
    %567 = vmatpush1.msra.mxu0 %v402
    %568 = vmatprep.subr.mxu0 %v400
    %569 = vmatpush1.msra.mxu0 %v399
    %570 = vmatprep.subr.mxu0 %v397
    %571 = vmatpush1.msra.mxu0 %v396
    %572 = vmatprep.subr.mxu0 %v394
    %573 = vmatpush1.msra.mxu0 %v393
    %574 = vmatprep.subr.mxu0 %v391
    %575 = vmatpush1.msra.mxu0 %v390
    %576 = vmatprep.subr.mxu0 %v388
    %577 = vmatpush1.msra.mxu0 %v387
    %578 = vmatprep.subr.mxu0 %v385
    %579 = vmatpush1.msra.mxu0 %v384
    %580 = vmatprep.subr.mxu0 %v382
    %581 = vmatpush1.msra.mxu0 %v381
    %582 = vmatprep.subr.mxu0 %v379
    %583 = vmatpush1.msra.mxu0 %v378
    %584 = vmatprep.subr.mxu0 %v376
    %585 = vmatpush1.msra.mxu0 %v375
    %586 = vmatprep.subr.mxu0 %v373
    %587 = vmatpush1.msra.mxu0 %v372
    %588 = vmatprep.subr.mxu0 %v466
    %589 = vmatpush2.msra.mxu0 %v465
    %590 = vmatprep.subr.mxu0 %v463
    %591 = vmatpush2.msra.mxu0 %v462
    %592 = vmatprep.subr.mxu0 %v460
    %593 = vmatpush2.msra.mxu0 %v459
    %594 = vmatprep.subr.mxu0 %v457
    %595 = vmatpush2.msra.mxu0 %v456
    %596 = vmatprep.subr.mxu0 %v454
    %597 = vmatpush2.msra.mxu0 %v453
    %598 = vmatprep.subr.mxu0 %v451
    %599 = vmatpush2.msra.mxu0 %v450
    %600 = vmatprep.subr.mxu0 %v448
    %601 = vmatpush2.msra.mxu0 %v447
    %602 = vmatprep.subr.mxu0 %v445
    %603 = vmatpush2.msra.mxu0 %v444
    %604 = vmatprep.subr.mxu0 %v442
    %605 = vmatpush2.msra.mxu0 %v441
    %606 = vmatprep.subr.mxu0 %v439
    %607 = vmatpush2.msra.mxu0 %v438
    %608 = vmatprep.subr.mxu0 %v436
    %609 = vmatpush2.msra.mxu0 %v435
    %610 = vmatprep.subr.mxu0 %v433
    %611 = vmatpush2.msra.mxu0 %v432
    %612 = vmatprep.subr.mxu0 %v430
    %613 = vmatpush2.msra.mxu0 %v429
    %614 = vmatprep.subr.mxu0 %v427
    %615 = vmatpush2.msra.mxu0 %v426
    %616 = vmatprep.subr.mxu0 %v424
    %617 = vmatpush2.msra.mxu0 %v423
    %618 = vmatprep.subr.mxu0 %v421
    %619 = vmatpush2.msra.mxu0 %v420
    %620 = vmatprep.mubr.f32.mxu0 %v275
    %621 = vmatmul.mubr.f32.gmra.mxu0 %v274
    %v622 = vpop.f32.mrf.mxu0
    %v623 = vadd.f32 %v552, %v622
    %v624 = vpop.f32.mrf.mxu0
    %v625 = vadd.f32 %v554, %v624
    %626 = vdwg.mxu0
    %627 = vmatprep.subr.mxu0 0.0
    %628 = vmatpush1.msra.mxu0 %v323
    %629 = vmatprep.subr.mxu0 0.0
    %630 = vmatpush1.msra.mxu0 %v320
    %631 = vmatprep.subr.mxu0 0.0
    %632 = vmatpush1.msra.mxu0 %v317
    %633 = vmatprep.subr.mxu0 0.0
    %634 = vmatpush1.msra.mxu0 %v314
    %635 = vmatprep.subr.mxu0 0.0
    %636 = vmatpush1.msra.mxu0 %v311
    %637 = vmatprep.subr.mxu0 0.0
    %638 = vmatpush1.msra.mxu0 %v308
    %639 = vmatprep.subr.mxu0 0.0
    %640 = vmatpush1.msra.mxu0 %v305
    %641 = vmatprep.subr.mxu0 0.0
    %642 = vmatpush1.msra.mxu0 %v302
    %643 = vmatprep.subr.mxu0 0.0
    %644 = vmatpush1.msra.mxu0 %v299
    %645 = vmatprep.subr.mxu0 0.0
    %646 = vmatpush1.msra.mxu0 %v296
    %647 = vmatprep.subr.mxu0 0.0
    %648 = vmatpush1.msra.mxu0 %v293
    %649 = vmatprep.subr.mxu0 0.0
    %650 = vmatpush1.msra.mxu0 %v290
    %651 = vmatprep.subr.mxu0 0.0
    %652 = vmatpush1.msra.mxu0 %v287
    %653 = vmatprep.subr.mxu0 0.0
    %654 = vmatpush1.msra.mxu0 %v284
    %655 = vmatprep.subr.mxu0 0.0
    %656 = vmatpush1.msra.mxu0 %v281
    %657 = vmatprep.subr.mxu0 0.0
    %658 = vmatpush1.msra.mxu0 %v278
    %659 = vmatprep.subr.mxu0 0.0
    %660 = vmatpush2.msra.mxu0 %v371
    %661 = vmatprep.subr.mxu0 0.0
    %662 = vmatpush2.msra.mxu0 %v368
    %663 = vmatprep.subr.mxu0 0.0
    %664 = vmatpush2.msra.mxu0 %v365
    %665 = vmatprep.subr.mxu0 0.0
    %666 = vmatpush2.msra.mxu0 %v362
    %667 = vmatprep.subr.mxu0 0.0
    %668 = vmatpush2.msra.mxu0 %v359
    %669 = vmatprep.subr.mxu0 0.0
    %670 = vmatpush2.msra.mxu0 %v356
    %671 = vmatprep.subr.mxu0 0.0
    %672 = vmatpush2.msra.mxu0 %v353
    %673 = vmatprep.subr.mxu0 0.0
    %674 = vmatpush2.msra.mxu0 %v350
    %675 = vmatprep.subr.mxu0 0.0
    %676 = vmatpush2.msra.mxu0 %v347
    %677 = vmatprep.subr.mxu0 0.0
    %678 = vmatpush2.msra.mxu0 %v344
    %679 = vmatprep.subr.mxu0 0.0
    %680 = vmatpush2.msra.mxu0 %v341
    %681 = vmatprep.subr.mxu0 0.0
    %682 = vmatpush2.msra.mxu0 %v338
    %683 = vmatprep.subr.mxu0 0.0
    %684 = vmatpush2.msra.mxu0 %v335
    %685 = vmatprep.subr.mxu0 0.0
    %686 = vmatpush2.msra.mxu0 %v332
    %687 = vmatprep.subr.mxu0 0.0
    %688 = vmatpush2.msra.mxu0 %v329
    %689 = vmatprep.subr.mxu0 0.0
    %690 = vmatpush2.msra.mxu0 %v326
    %691 = vmatprep.mubr.f32.mxu0 %v273
    %692 = vmatmul.mubr.f32.gmra.mxu0 %v272
    %v693 = vpop.f32.mrf.mxu0
    %v694 = vadd.f32 %v481, %v693
    %v695 = vpop.f32.mrf.mxu0
    %696 = vdwg.mxu0
    %697 = vmatprep.subr.mxu0 0.0
    %698 = vmatpush1.msra.mxu0 %v419
    %699 = vmatprep.subr.mxu0 0.0
    %700 = vmatpush1.msra.mxu0 %v416
    %701 = vmatprep.subr.mxu0 0.0
    %702 = vmatpush1.msra.mxu0 %v413
    %703 = vmatprep.subr.mxu0 0.0
    %704 = vmatpush1.msra.mxu0 %v410
    %705 = vmatprep.subr.mxu0 0.0
    %706 = vmatpush1.msra.mxu0 %v407
    %707 = vmatprep.subr.mxu0 0.0
    %708 = vmatpush1.msra.mxu0 %v404
    %709 = vmatprep.subr.mxu0 0.0
    %710 = vmatpush1.msra.mxu0 %v401
    %711 = vmatprep.subr.mxu0 0.0
    %712 = vmatpush1.msra.mxu0 %v398
    %713 = vmatprep.subr.mxu0 0.0
    %714 = vmatpush1.msra.mxu0 %v395
    %715 = vmatprep.subr.mxu0 0.0
    %716 = vmatpush1.msra.mxu0 %v392
    %717 = vmatprep.subr.mxu0 0.0
    %718 = vmatpush1.msra.mxu0 %v389
    %719 = vmatprep.subr.mxu0 0.0
    %720 = vmatpush1.msra.mxu0 %v386
    %721 = vmatprep.subr.mxu0 0.0
    %722 = vmatpush1.msra.mxu0 %v383
    %723 = vmatprep.subr.mxu0 0.0
    %724 = vmatpush1.msra.mxu0 %v380
    %725 = vmatprep.subr.mxu0 0.0
    %726 = vmatpush1.msra.mxu0 %v377
    %727 = vmatprep.subr.mxu0 0.0
    %728 = vmatpush1.msra.mxu0 %v374
    %729 = vmatprep.subr.mxu0 0.0
    %730 = vmatpush2.msra.mxu0 %v467
    %731 = vmatprep.subr.mxu0 0.0
    %732 = vmatpush2.msra.mxu0 %v464
    %733 = vmatprep.subr.mxu0 0.0
    %734 = vmatpush2.msra.mxu0 %v461
    %735 = vmatprep.subr.mxu0 0.0
    %736 = vmatpush2.msra.mxu0 %v458
    %737 = vmatprep.subr.mxu0 0.0
    %738 = vmatpush2.msra.mxu0 %v455
    %739 = vmatprep.subr.mxu0 0.0
    %740 = vmatpush2.msra.mxu0 %v452
    %741 = vmatprep.subr.mxu0 0.0
    %742 = vmatpush2.msra.mxu0 %v449
    %743 = vmatprep.subr.mxu0 0.0
    %744 = vmatpush2.msra.mxu0 %v446
    %745 = vmatprep.subr.mxu0 0.0
    %746 = vmatpush2.msra.mxu0 %v443
    %747 = vmatprep.subr.mxu0 0.0
    %748 = vmatpush2.msra.mxu0 %v440
    %749 = vmatprep.subr.mxu0 0.0
    %750 = vmatpush2.msra.mxu0 %v437
    %751 = vmatprep.subr.mxu0 0.0
    %752 = vmatpush2.msra.mxu0 %v434
    %753 = vmatprep.subr.mxu0 0.0
    %754 = vmatpush2.msra.mxu0 %v431
    %755 = vmatprep.subr.mxu0 0.0
    %756 = vmatpush2.msra.mxu0 %v428
    %757 = vmatprep.subr.mxu0 0.0
    %758 = vmatpush2.msra.mxu0 %v425
    %759 = vmatprep.subr.mxu0 0.0
    %760 = vmatpush2.msra.mxu0 %v422
    %761 = vmatprep.mubr.f32.mxu0 %v275
    %762 = vmatmul.mubr.f32.gmra.mxu0 %v274
    %v763 = vpop.f32.mrf.mxu0
    %v764 = vadd.f32 %v694, %v763
    %v765 = vpop.f32.mrf.mxu0
    %766 = vdwg.mxu0
    %v767 = vmax.f32 %v623, 0.0
    %v768 = vmax.f32 %v625, 0.0
    %v769 = vmax.f32 %v764, 0.0
    %v770 = vld [vmem:[#allocation10] sm:$0xff]
    %v771 = vld [vmem:[#allocation10 + $0x8] sm:$0xff]
    %v772 = vld [vmem:[#allocation10 + $0x10] sm:$0xff]
    %v773 = vld [vmem:[#allocation10 + $0x18] sm:$0xff]
    %v774 = vld [vmem:[#allocation10 + $0x20] sm:$0xff]
    %v775 = vld [vmem:[#allocation10 + $0x28] sm:$0xff]
    %v776 = vld [vmem:[#allocation10 + $0x30] sm:$0xff]
    %v777 = vld [vmem:[#allocation10 + $0x38] sm:$0xff]
    %v778 = vld [vmem:[#allocation10 + $0x40] sm:$0xff]
    %v779 = vld [vmem:[#allocation10 + $0x48] sm:$0xff]
    %v780 = vld [vmem:[#allocation10 + $0x50] sm:$0xff]
    %v781 = vld [vmem:[#allocation10 + $0x58] sm:$0xff]
    %v782 = vld [vmem:[#allocation10 + $0x60] sm:$0xff]
    %v783 = vld [vmem:[#allocation10 + $0x68] sm:$0xff]
    %v784 = vld [vmem:[#allocation10 + $0x70] sm:$0xff]
    %v785 = vld [vmem:[#allocation10 + $0x78] sm:$0xff]
    %v786 = vld [vmem:[#allocation10 + $0x80] sm:$0xff]
    %v787 = vld [vmem:[#allocation10 + $0x88] sm:$0xff]
    %v788 = vld [vmem:[#allocation10 + $0x90] sm:$0xff]
    %v789 = vld [vmem:[#allocation10 + $0x98] sm:$0xff]
    %v790 = vld [vmem:[#allocation10 + $0xa0] sm:$0xff]
    %v791 = vld [vmem:[#allocation10 + $0xa8] sm:$0xff]
    %v792 = vld [vmem:[#allocation10 + $0xb0] sm:$0xff]
    %v793 = vld [vmem:[#allocation10 + $0xb8] sm:$0xff]
    %v794 = vld [vmem:[#allocation10 + $0xc0] sm:$0xff]
    %v795 = vld [vmem:[#allocation10 + $0xc8] sm:$0xff]
    %v796 = vld [vmem:[#allocation10 + $0xd0] sm:$0xff]
    %v797 = vld [vmem:[#allocation10 + $0xd8] sm:$0xff]
    %v798 = vld [vmem:[#allocation10 + $0xe0] sm:$0xff]
    %v799 = vld [vmem:[#allocation10 + $0xe8] sm:$0xff]
    %v800 = vld [vmem:[#allocation10 + $0xf0] sm:$0xff]
    %v801 = vld [vmem:[#allocation10 + $0xf8] sm:$0xff]
    %v802 = vld [vmem:[#allocation10 + $0x100] sm:$0xff]
    %v803 = vld [vmem:[#allocation10 + $0x108] sm:$0xff]
    %v804 = vld [vmem:[#allocation10 + $0x110] sm:$0xff]
    %v805 = vld [vmem:[#allocation10 + $0x118] sm:$0xff]
    %v806 = vld [vmem:[#allocation10 + $0x120] sm:$0xff]
    %v807 = vld [vmem:[#allocation10 + $0x128] sm:$0xff]
    %v808 = vld [vmem:[#allocation10 + $0x130] sm:$0xff]
    %v809 = vld [vmem:[#allocation10 + $0x138] sm:$0xff]
    %v810 = vld [vmem:[#allocation10 + $0x140] sm:$0xff]
    %v811 = vld [vmem:[#allocation10 + $0x148] sm:$0xff]
    %v812 = vld [vmem:[#allocation10 + $0x150] sm:$0xff]
    %v813 = vld [vmem:[#allocation10 + $0x158] sm:$0xff]
    %v814 = vld [vmem:[#allocation10 + $0x160] sm:$0xff]
    %v815 = vld [vmem:[#allocation10 + $0x168] sm:$0xff]
    %v816 = vld [vmem:[#allocation10 + $0x170] sm:$0xff]
    %v817 = vld [vmem:[#allocation10 + $0x178] sm:$0xff]
    %v818 = vld [vmem:[%s6] sm:$0x1]
    %v820 = vlaneseq
    %v821 = vshrl.u32 %v820, 7
    %v822 = vsub.s32 0, %v821
    %v823 = vrot.slane %v818, %v822
    %825 = vmatprep.subr.mxu0 0.0
    %826 = vmatpush1.msra.mxu0 %v785
    %827 = vmatprep.subr.mxu0 0.0
    %828 = vmatpush1.msra.mxu0 %v784
    %829 = vmatprep.subr.mxu0 0.0
    %830 = vmatpush1.msra.mxu0 %v783
    %831 = vmatprep.subr.mxu0 0.0
    %832 = vmatpush1.msra.mxu0 %v782
    %833 = vmatprep.subr.mxu0 0.0
    %834 = vmatpush1.msra.mxu0 %v781
    %835 = vmatprep.subr.mxu0 0.0
    %836 = vmatpush1.msra.mxu0 %v780
    %837 = vmatprep.subr.mxu0 0.0
    %838 = vmatpush1.msra.mxu0 %v779
    %839 = vmatprep.subr.mxu0 0.0
    %840 = vmatpush1.msra.mxu0 %v778
    %841 = vmatprep.subr.mxu0 0.0
    %842 = vmatpush1.msra.mxu0 %v777
    %843 = vmatprep.subr.mxu0 0.0
    %844 = vmatpush1.msra.mxu0 %v776
    %845 = vmatprep.subr.mxu0 0.0
    %846 = vmatpush1.msra.mxu0 %v775
    %847 = vmatprep.subr.mxu0 0.0
    %848 = vmatpush1.msra.mxu0 %v774
    %849 = vmatprep.subr.mxu0 0.0
    %850 = vmatpush1.msra.mxu0 %v773
    %851 = vmatprep.subr.mxu0 0.0
    %852 = vmatpush1.msra.mxu0 %v772
    %853 = vmatprep.subr.mxu0 0.0
    %854 = vmatpush1.msra.mxu0 %v771
    %855 = vmatprep.subr.mxu0 0.0
    %856 = vmatpush1.msra.mxu0 %v770
    %857 = vmatprep.subr.mxu0 0.0
    %858 = vmatpush2.msra.mxu0 %v801
    %859 = vmatprep.subr.mxu0 0.0
    %860 = vmatpush2.msra.mxu0 %v800
    %861 = vmatprep.subr.mxu0 0.0
    %862 = vmatpush2.msra.mxu0 %v799
    %863 = vmatprep.subr.mxu0 0.0
    %864 = vmatpush2.msra.mxu0 %v798
    %865 = vmatprep.subr.mxu0 0.0
    %866 = vmatpush2.msra.mxu0 %v797
    %867 = vmatprep.subr.mxu0 0.0
    %868 = vmatpush2.msra.mxu0 %v796
    %869 = vmatprep.subr.mxu0 0.0
    %870 = vmatpush2.msra.mxu0 %v795
    %871 = vmatprep.subr.mxu0 0.0
    %872 = vmatpush2.msra.mxu0 %v794
    %873 = vmatprep.subr.mxu0 0.0
    %874 = vmatpush2.msra.mxu0 %v793
    %875 = vmatprep.subr.mxu0 0.0
    %876 = vmatpush2.msra.mxu0 %v792
    %877 = vmatprep.subr.mxu0 0.0
    %878 = vmatpush2.msra.mxu0 %v791
    %879 = vmatprep.subr.mxu0 0.0
    %880 = vmatpush2.msra.mxu0 %v790
    %881 = vmatprep.subr.mxu0 0.0
    %882 = vmatpush2.msra.mxu0 %v789
    %883 = vmatprep.subr.mxu0 0.0
    %884 = vmatpush2.msra.mxu0 %v788
    %885 = vmatprep.subr.mxu0 0.0
    %886 = vmatpush2.msra.mxu0 %v787
    %887 = vmatprep.subr.mxu0 0.0
    %888 = vmatpush2.msra.mxu0 %v786
    %889 = vmatprep.mubr.f32.mxu0 %v768
    %890 = vmatmul.mubr.f32.gmra.mxu0 %v767
    %v891 = vpop.f32.mrf.mxu0
    %v892 = vadd.f32 %v823, %v891
    %v893 = vpop.f32.mrf.mxu0
    %894 = vdwg.mxu0
    %895 = vmatprep.subr.mxu0 0.0
    %896 = vmatpush1.msra.mxu0 %v817
    %897 = vmatprep.subr.mxu0 0.0
    %898 = vmatpush1.msra.mxu0 %v816
    %899 = vmatprep.subr.mxu0 0.0
    %900 = vmatpush1.msra.mxu0 %v815
    %901 = vmatprep.subr.mxu0 0.0
    %902 = vmatpush1.msra.mxu0 %v814
    %903 = vmatprep.subr.mxu0 0.0
    %904 = vmatpush1.msra.mxu0 %v813
    %905 = vmatprep.subr.mxu0 0.0
    %906 = vmatpush1.msra.mxu0 %v812
    %907 = vmatprep.subr.mxu0 0.0
    %908 = vmatpush1.msra.mxu0 %v811
    %909 = vmatprep.subr.mxu0 0.0
    %910 = vmatpush1.msra.mxu0 %v810
    %911 = vmatprep.subr.mxu0 0.0
    %912 = vmatpush1.msra.mxu0 %v809
    %913 = vmatprep.subr.mxu0 0.0
    %914 = vmatpush1.msra.mxu0 %v808
    %915 = vmatprep.subr.mxu0 0.0
    %916 = vmatpush1.msra.mxu0 %v807
    %917 = vmatprep.subr.mxu0 0.0
    %918 = vmatpush1.msra.mxu0 %v806
    %919 = vmatprep.subr.mxu0 0.0
    %920 = vmatpush1.msra.mxu0 %v805
    %921 = vmatprep.subr.mxu0 0.0
    %922 = vmatpush1.msra.mxu0 %v804
    %923 = vmatprep.subr.mxu0 0.0
    %924 = vmatpush1.msra.mxu0 %v803
    %925 = vmatprep.subr.mxu0 0.0
    %926 = vmatpush1.msra.mxu0 %v802
    %927 = vmatprep.subr.mxu0 0.0
    %928 = vmatpush2.msra.mxu0 0.0
    %929 = vmatprep.subr.mxu0 0.0
    %930 = vmatpush2.msra.mxu0 0.0
    %931 = vmatprep.subr.mxu0 0.0
    %932 = vmatpush2.msra.mxu0 0.0
    %933 = vmatprep.subr.mxu0 0.0
    %934 = vmatpush2.msra.mxu0 0.0
    %935 = vmatprep.subr.mxu0 0.0
    %936 = vmatpush2.msra.mxu0 0.0
    %937 = vmatprep.subr.mxu0 0.0
    %938 = vmatpush2.msra.mxu0 0.0
    %939 = vmatprep.subr.mxu0 0.0
    %940 = vmatpush2.msra.mxu0 0.0
    %941 = vmatprep.subr.mxu0 0.0
    %942 = vmatpush2.msra.mxu0 0.0
    %943 = vmatprep.subr.mxu0 0.0
    %944 = vmatpush2.msra.mxu0 0.0
    %945 = vmatprep.subr.mxu0 0.0
    %946 = vmatpush2.msra.mxu0 0.0
    %947 = vmatprep.subr.mxu0 0.0
    %948 = vmatpush2.msra.mxu0 0.0
    %949 = vmatprep.subr.mxu0 0.0
    %950 = vmatpush2.msra.mxu0 0.0
    %951 = vmatprep.subr.mxu0 0.0
    %952 = vmatpush2.msra.mxu0 0.0
    %953 = vmatprep.subr.mxu0 0.0
    %954 = vmatpush2.msra.mxu0 0.0
    %955 = vmatprep.subr.mxu0 0.0
    %956 = vmatpush2.msra.mxu0 0.0
    %957 = vmatprep.subr.mxu0 0.0
    %958 = vmatpush2.msra.mxu0 0.0
    %959 = vmatprep.mubr.f32.mxu0 0.0
    %960 = vmatmul.mubr.f32.gmra.mxu0 %v769
    %v961 = vpop.f32.mrf.mxu0
    %v962 = vadd.f32 %v892, %v961
    %v963 = vpop.f32.mrf.mxu0
    %964 = vdwg.mxu0
    %v965 = vtanh.pop %v962
    %966 = vst [vmem:[#allocation11] sm:$0xff] %v965
    // Predicated region
    $region50: #{tpu_custom_call.1} parent=1 // pred_check
      _
    $region51: #{tpu_custom_call.1} parent=1 // pred_check_branch
      %968 = sbr.rel (0) target = $region53
    $region52: #{tpu_custom_call.1} parent=1 // pred_region
      %s970 = ssub.s32 128, 128
      %971 = vsyncadd [#allocation4], %s970
      %s973 = sshll.u32 [#allocation11], 4
      %s974 = int_to_ptr.vmem [resolvable:$true] %s973
      %976 = dma.vmem_to_hbm [thread:$0]  %s974, 128, %s7, [#allocation4]
    $region53: #{tpu_custom_call.1} parent=1 // pred_fallthru
      _
    // Predicated region
    $region54: #{tpu_custom_call.1} parent=1 // pred_check
      _
    $region55: #{tpu_custom_call.1} parent=1 // pred_check_branch
      %978 = sbr.rel (0) target = $region57
    $region56: #{tpu_custom_call.1} parent=1 // pred_region
      %979 = dma.done [#allocation4], 128
    $region57: #{tpu_custom_call.1} parent=1 // pred_fallthru
      _
    %980 = vsyncpa [#allocation3], 1
    %981 = vsyncpa [#allocation6], 1
    %982 = vsyncpa [#allocation9], 1
    %983 = vsyncpa [#allocation4], 1

// kernel: tpu_custom_call.1
$region0: #{tpu_custom_call.1}
  #allocation0 [shape = 'u32[]', space=smem, size = 0x4, offset = 0x4, fixed_abs, tag = 'smem constant byte address 0x4 - core index']
  #allocation1 [shape = 'u32[144,128]{1,0:T(1,128)}', space=vmem, size = 0x12000, scoped, tag = 'internal scratch']
  %s0 = inlined_call_operand.hbm [shape: f32[8,24], index: 0, kind: input, shape index: {}]
  %s1 = inlined_call_operand.hbm [shape: f32[24,512], index: 1, kind: input, shape index: {}]
  %s2 = inlined_call_operand.hbm [shape: f32[1,512], index: 2, kind: input, shape index: {}]
  %s3 = inlined_call_operand.hbm [shape: f32[512,384], index: 3, kind: input, shape index: {}]
  %s4 = inlined_call_operand.vmem [shape: f32[1,384], index: 4, kind: input, shape index: {}]
  %s5 = inlined_call_operand.hbm [shape: f32[384,128], index: 5, kind: input, shape index: {}]
  %s6 = inlined_call_operand.vmem [shape: f32[1,128], index: 6, kind: input, shape index: {}]
  %s7 = inlined_call_operand.hbm [shape: f32[8,128], index: 7, kind: output, shape index: {}]
  %s8 = sld [smem:[#allocation0]]
  $region58: #{tpu_custom_call.1} parent=0
    _
  %s10 = ssub.s32 1, %s8
  %s11 = scalar_select 0, %s10, %s8
  $region1: #{tpu_custom_call.1} parent=0
    #allocation2 [shape = 'u8[4096]{0}', space=vmem, size = 0x1000, scoped, tag = 'input window, operand 0, single buffered']
    #allocation3 [shape = 's32[1]{0}', space=sflag, size = 0x4, scoped, tag = 'scoped memory for tpu_custom_call.1']
    #allocation4 [shape = 's32[1]{0}', space=sflag, size = 0x4, scoped, tag = 'scoped memory for tpu_custom_call.1']
    #allocation5 [shape = 'u8[49152]{0}', space=vmem, size = 0xc000, scoped, tag = 'input window, operand 1, single buffered']
    #allocation6 [shape = 's32[1]{0}', space=sflag, size = 0x4, scoped, tag = 'scoped memory for tpu_custom_call.1']
    #allocation7 [shape = 'u8[2048]{0}', space=vmem, size = 0x800, scoped, tag = 'input window, operand 2, single buffered']
    #allocation8 [shape = 'u8[786432]{0}', space=vmem, size = 0xc0000, scoped, tag = 'input window, operand 3, single buffered']
    #allocation9 [shape = 's32[1]{0}', space=sflag, size = 0x4, scoped, tag = 'scoped memory for tpu_custom_call.1']
    #allocation10 [shape = 'u8[196608]{0}', space=vmem, size = 0x30000, scoped, tag = 'input window, operand 5, single buffered']
    #allocation11 [shape = 'u8[4096]{0}', space=vmem, size = 0x1000, scoped, tag = 'output window, operand 0, single buffered']
    %12 = vsyncpa [#allocation3], 0
    %13 = vsyncpa [#allocation6], 0
    %14 = vsyncpa [#allocation9], 0
    %15 = vsyncpa [#allocation4], 0
    // Predicated region
    $region2: #{tpu_custom_call.1} parent=1 // pred_check
      _
    $region3: #{tpu_custom_call.1} parent=1 // pred_check_branch
      %17 = sbr.rel (0) target = $region5
    $region4: #{tpu_custom_call.1} parent=1 // pred_region
      %s19 = ssub.s32 128, 128
      %20 = vsyncadd [#allocation3], %s19
      %s22 = sshll.u32 [#allocation2], 4
      %s23 = int_to_ptr.vmem [resolvable:$true] %s22
      %25 = dma.hbm_to_vmem [thread:$0]  %s0, 128, %s23, [#allocation3]
    $region5: #{tpu_custom_call.1} parent=1 // pred_fallthru
      _
    // Predicated region
    $region6: #{tpu_custom_call.1} parent=1 // pred_check
      _
    $region7: #{tpu_custom_call.1} parent=1 // pred_check_branch
      %27 = sbr.rel (0) target = $region9
    $region8: #{tpu_custom_call.1} parent=1 // pred_region
      %s29 = ssub.s32 1536, 1536
      %30 = vsyncadd [#allocation6], %s29
      %s31 = sshll.u32 [#allocation5], 4
      %s32 = int_to_ptr.vmem [resolvable:$true] %s31
      %37 = dma.hbm_to_vmem [thread:$0]  %s1, 1536, %s32, [#allocation6], 512, 512, 32
    $region9: #{tpu_custom_call.1} parent=1 // pred_fallthru
      _
    // Predicated region
    $region10: #{tpu_custom_call.1} parent=1 // pred_check
      _
    $region11: #{tpu_custom_call.1} parent=1 // pred_check_branch
      %39 = sbr.rel (0) target = $region13
    $region12: #{tpu_custom_call.1} parent=1 // pred_region
      %s41 = ssub.s32 64, 64
      %42 = vsyncadd [#allocation6], %s41
      %s44 = sshll.u32 [#allocation7], 4
      %s45 = int_to_ptr.vmem [resolvable:$true] %s44
      %47 = dma.hbm_to_vmem [thread:$0]  %s2, 64, %s45, [#allocation6]
    $region13: #{tpu_custom_call.1} parent=1 // pred_fallthru
      _
    // Predicated region
    $region14: #{tpu_custom_call.1} parent=1 // pred_check
      _
    $region15: #{tpu_custom_call.1} parent=1 // pred_check_branch
      %49 = sbr.rel (0) target = $region17
    $region16: #{tpu_custom_call.1} parent=1 // pred_region
      %s51 = ssub.s32 24576, 24576
      %52 = vsyncadd [#allocation9], %s51
      %s53 = sshll.u32 [#allocation8], 4
      %s54 = int_to_ptr.vmem [resolvable:$true] %s53
      %59 = dma.hbm_to_vmem [thread:$0]  %s3, 24576, %s54, [#allocation9], 384, 384, 24
    $region17: #{tpu_custom_call.1} parent=1 // pred_fallthru
      _
    // Predicated region
    $region18: #{tpu_custom_call.1} parent=1 // pred_check
      _
    $region19: #{tpu_custom_call.1} parent=1 // pred_check_branch
      %61 = sbr.rel (0) target = $region21
    $region20: #{tpu_custom_call.1} parent=1 // pred_region
      _
    $region21: #{tpu_custom_call.1} parent=1 // pred_fallthru
      _
    // Predicated region
    $region22: #{tpu_custom_call.1} parent=1 // pred_check
      _
    $region23: #{tpu_custom_call.1} parent=1 // pred_check_branch
      %63 = sbr.rel (0) target = $region25
    $region24: #{tpu_custom_call.1} parent=1 // pred_region
      %s65 = ssub.s32 6144, 6144
      %66 = vsyncadd [#allocation9], %s65
      %s67 = sshll.u32 [#allocation10], 4
      %s68 = int_to_ptr.vmem [resolvable:$true] %s67
      %73 = dma.hbm_to_vmem [thread:$0]  %s5, 6144, %s68, [#allocation9], 128, 128, 8
    $region25: #{tpu_custom_call.1} parent=1 // pred_fallthru
      _
    // Predicated region
    $region26: #{tpu_custom_call.1} parent=1 // pred_check
      _
    $region27: #{tpu_custom_call.1} parent=1 // pred_check_branch
      %75 = sbr.rel (0) target = $region29
    $region28: #{tpu_custom_call.1} parent=1 // pred_region
      _
    $region29: #{tpu_custom_call.1} parent=1 // pred_fallthru
      _
    // Predicated region
    $region30: #{tpu_custom_call.1} parent=1 // pred_check
      _
    $region31: #{tpu_custom_call.1} parent=1 // pred_check_branch
      %77 = sbr.rel (0) target = $region33
    $region32: #{tpu_custom_call.1} parent=1 // pred_region
      %78 = dma.done [#allocation3], 128
    $region33: #{tpu_custom_call.1} parent=1 // pred_fallthru
      _
    // Predicated region
    $region34: #{tpu_custom_call.1} parent=1 // pred_check
      _
    $region35: #{tpu_custom_call.1} parent=1 // pred_check_branch
      %80 = sbr.rel (0) target = $region37
    $region36: #{tpu_custom_call.1} parent=1 // pred_region
      %81 = dma.done [#allocation6], 1536
    $region37: #{tpu_custom_call.1} parent=1 // pred_fallthru
      _
    // Predicated region
    $region38: #{tpu_custom_call.1} parent=1 // pred_check
      _
    $region39: #{tpu_custom_call.1} parent=1 // pred_check_branch
      %83 = sbr.rel (0) target = $region41
    $region40: #{tpu_custom_call.1} parent=1 // pred_region
      %84 = dma.done [#allocation6], 64
    $region41: #{tpu_custom_call.1} parent=1 // pred_fallthru
      _
    // Predicated region
    $region42: #{tpu_custom_call.1} parent=1 // pred_check
      _
    $region43: #{tpu_custom_call.1} parent=1 // pred_check_branch
      %86 = sbr.rel (0) target = $region45
    $region44: #{tpu_custom_call.1} parent=1 // pred_region
      %87 = dma.done [#allocation9], 24576
    $region45: #{tpu_custom_call.1} parent=1 // pred_fallthru
      _
    // Predicated region
    $region46: #{tpu_custom_call.1} parent=1 // pred_check
      _
    $region47: #{tpu_custom_call.1} parent=1 // pred_check_branch
      %89 = sbr.rel (0) target = $region49
    $region48: #{tpu_custom_call.1} parent=1 // pred_region
      %90 = dma.done [#allocation9], 6144
    $region49: #{tpu_custom_call.1} parent=1 // pred_fallthru
      _
    %v91 = vld [vmem:[#allocation2] sm:$0xff]
    %v92 = vld [vmem:[#allocation5] sm:$0xff]
    %v93 = vld [vmem:[#allocation5 + $0x8] sm:$0xff]
    %v94 = vld [vmem:[#allocation5 + $0x10] sm:$0xff]
    %v95 = vld [vmem:[#allocation5 + $0x18] sm:$0xff]
    %v96 = vld [vmem:[#allocation5 + $0x20] sm:$0xff]
    %v97 = vld [vmem:[#allocation5 + $0x28] sm:$0xff]
    %v98 = vld [vmem:[#allocation5 + $0x30] sm:$0xff]
    %v99 = vld [vmem:[#allocation5 + $0x38] sm:$0xff]
    %v100 = vld [vmem:[#allocation5 + $0x40] sm:$0xff]
    %v101 = vld [vmem:[#allocation5 + $0x48] sm:$0xff]
    %v102 = vld [vmem:[#allocation5 + $0x50] sm:$0xff]
    %v103 = vld [vmem:[#allocation5 + $0x58] sm:$0xff]
    %v104 = vld [vmem:[#allocation7] sm:$0xf]
    %v106 = vlaneseq
    %v107 = vshrl.u32 %v106, 7
    %v108 = vsub.s32 0, %v107
    %v109 = vrot.slane %v104, %v108
    %v110 = vlaneseq
    %v111 = vshrl.u32 %v110, 7
    %v112 = vsub.s32 1, %v111
    %v113 = vrot.slane %v104, %v112
    %v114 = vlaneseq
    %v115 = vshrl.u32 %v114, 7
    %v116 = vsub.s32 2, %v115
    %v117 = vrot.slane %v104, %v116
    %v118 = vlaneseq
    %v119 = vshrl.u32 %v118, 7
    %v120 = vsub.s32 3, %v119
    %v121 = vrot.slane %v104, %v120
    %vm126 = vcmask 195584
    %v128 = vsel %vm126, %v91, 0
    %130 = vmatprep.subr.mxu0 0.0
    %131 = vmatpush1.msra.mxu0 0.0
    %132 = vmatprep.subr.mxu0 0.0
    %133 = vmatpush1.msra.mxu0 0.0
    %134 = vmatprep.subr.mxu0 0.0
    %135 = vmatpush1.msra.mxu0 0.0
    %136 = vmatprep.subr.mxu0 0.0
    %137 = vmatpush1.msra.mxu0 0.0
    %138 = vmatprep.subr.mxu0 0.0
    %139 = vmatpush1.msra.mxu0 0.0
    %140 = vmatprep.subr.mxu0 0.0
    %141 = vmatpush1.msra.mxu0 0.0
    %142 = vmatprep.subr.mxu0 0.0
    %143 = vmatpush1.msra.mxu0 0.0
    %144 = vmatprep.subr.mxu0 0.0
    %145 = vmatpush1.msra.mxu0 0.0
    %146 = vmatprep.subr.mxu0 0.0
    %147 = vmatpush1.msra.mxu0 0.0
    %148 = vmatprep.subr.mxu0 0.0
    %149 = vmatpush1.msra.mxu0 0.0
    %150 = vmatprep.subr.mxu0 0.0
    %151 = vmatpush1.msra.mxu0 0.0
    %152 = vmatprep.subr.mxu0 0.0
    %153 = vmatpush1.msra.mxu0 0.0
    %154 = vmatprep.subr.mxu0 0.0
    %155 = vmatpush1.msra.mxu0 0.0
    %156 = vmatprep.subr.mxu0 %v101
    %157 = vmatpush1.msra.mxu0 %v100
    %158 = vmatprep.subr.mxu0 %v97
    %159 = vmatpush1.msra.mxu0 %v96
    %160 = vmatprep.subr.mxu0 %v93
    %161 = vmatpush1.msra.mxu0 %v92
    %162 = vmatprep.subr.mxu0 0.0
    %163 = vmatpush2.msra.mxu0 0.0
    %164 = vmatprep.subr.mxu0 0.0
    %165 = vmatpush2.msra.mxu0 0.0
    %166 = vmatprep.subr.mxu0 0.0
    %167 = vmatpush2.msra.mxu0 0.0
    %168 = vmatprep.subr.mxu0 0.0
    %169 = vmatpush2.msra.mxu0 0.0
    %170 = vmatprep.subr.mxu0 0.0
    %171 = vmatpush2.msra.mxu0 0.0
    %172 = vmatprep.subr.mxu0 0.0
    %173 = vmatpush2.msra.mxu0 0.0
    %174 = vmatprep.subr.mxu0 0.0
    %175 = vmatpush2.msra.mxu0 0.0
    %176 = vmatprep.subr.mxu0 0.0
    %177 = vmatpush2.msra.mxu0 0.0
    %178 = vmatprep.subr.mxu0 0.0
    %179 = vmatpush2.msra.mxu0 0.0
    %180 = vmatprep.subr.mxu0 0.0
    %181 = vmatpush2.msra.mxu0 0.0
    %182 = vmatprep.subr.mxu0 0.0
    %183 = vmatpush2.msra.mxu0 0.0
    %184 = vmatprep.subr.mxu0 0.0
    %185 = vmatpush2.msra.mxu0 0.0
    %186 = vmatprep.subr.mxu0 0.0
    %187 = vmatpush2.msra.mxu0 0.0
    %188 = vmatprep.subr.mxu0 0.0
    %189 = vmatpush2.msra.mxu0 0.0
    %190 = vmatprep.subr.mxu0 0.0
    %191 = vmatpush2.msra.mxu0 0.0
    %192 = vmatprep.subr.mxu0 0.0
    %193 = vmatpush2.msra.mxu0 0.0
    %194 = vmatprep.mubr.f32.mxu0 0.0
    %195 = vmatmul.mubr.f32.gmra.mxu0 %v128
    %v196 = vpop.f32.mrf.mxu0
    %v197 = vadd.f32 %v109, %v196
    %v198 = vpop.f32.mrf.mxu0
    %v199 = vadd.f32 %v113, %v198
    %200 = vdwg.mxu0
    %201 = vmatprep.subr.mxu0 0.0
    %202 = vmatpush1.msra.mxu0 0.0
    %203 = vmatprep.subr.mxu0 0.0
    %204 = vmatpush1.msra.mxu0 0.0
    %205 = vmatprep.subr.mxu0 0.0
    %206 = vmatpush1.msra.mxu0 0.0
    %207 = vmatprep.subr.mxu0 0.0
    %208 = vmatpush1.msra.mxu0 0.0
    %209 = vmatprep.subr.mxu0 0.0
    %210 = vmatpush1.msra.mxu0 0.0
    %211 = vmatprep.subr.mxu0 0.0
    %212 = vmatpush1.msra.mxu0 0.0
    %213 = vmatprep.subr.mxu0 0.0
    %214 = vmatpush1.msra.mxu0 0.0
    %215 = vmatprep.subr.mxu0 0.0
    %216 = vmatpush1.msra.mxu0 0.0
    %217 = vmatprep.subr.mxu0 0.0
    %218 = vmatpush1.msra.mxu0 0.0
    %219 = vmatprep.subr.mxu0 0.0
    %220 = vmatpush1.msra.mxu0 0.0
    %221 = vmatprep.subr.mxu0 0.0
    %222 = vmatpush1.msra.mxu0 0.0
    %223 = vmatprep.subr.mxu0 0.0
    %224 = vmatpush1.msra.mxu0 0.0
    %225 = vmatprep.subr.mxu0 0.0
    %226 = vmatpush1.msra.mxu0 0.0
    %227 = vmatprep.subr.mxu0 %v103
    %228 = vmatpush1.msra.mxu0 %v102
    %229 = vmatprep.subr.mxu0 %v99
    %230 = vmatpush1.msra.mxu0 %v98
    %231 = vmatprep.subr.mxu0 %v95
    %232 = vmatpush1.msra.mxu0 %v94
    %233 = vmatprep.subr.mxu0 0.0
    %234 = vmatpush2.msra.mxu0 0.0
    %235 = vmatprep.subr.mxu0 0.0
    %236 = vmatpush2.msra.mxu0 0.0
    %237 = vmatprep.subr.mxu0 0.0
    %238 = vmatpush2.msra.mxu0 0.0
    %239 = vmatprep.subr.mxu0 0.0
    %240 = vmatpush2.msra.mxu0 0.0
    %241 = vmatprep.subr.mxu0 0.0
    %242 = vmatpush2.msra.mxu0 0.0
    %243 = vmatprep.subr.mxu0 0.0
    %244 = vmatpush2.msra.mxu0 0.0
    %245 = vmatprep.subr.mxu0 0.0
    %246 = vmatpush2.msra.mxu0 0.0
    %247 = vmatprep.subr.mxu0 0.0
    %248 = vmatpush2.msra.mxu0 0.0
    %249 = vmatprep.subr.mxu0 0.0
    %250 = vmatpush2.msra.mxu0 0.0
    %251 = vmatprep.subr.mxu0 0.0
    %252 = vmatpush2.msra.mxu0 0.0
    %253 = vmatprep.subr.mxu0 0.0
    %254 = vmatpush2.msra.mxu0 0.0
    %255 = vmatprep.subr.mxu0 0.0
    %256 = vmatpush2.msra.mxu0 0.0
    %257 = vmatprep.subr.mxu0 0.0
    %258 = vmatpush2.msra.mxu0 0.0
    %259 = vmatprep.subr.mxu0 0.0
    %260 = vmatpush2.msra.mxu0 0.0
    %261 = vmatprep.subr.mxu0 0.0
    %262 = vmatpush2.msra.mxu0 0.0
    %263 = vmatprep.subr.mxu0 0.0
    %264 = vmatpush2.msra.mxu0 0.0
    %265 = vmatprep.mubr.f32.mxu0 0.0
    %266 = vmatmul.mubr.f32.gmra.mxu0 %v128
    %v267 = vpop.f32.mrf.mxu0
    %v268 = vadd.f32 %v117, %v267
    %v269 = vpop.f32.mrf.mxu0
    %v270 = vadd.f32 %v121, %v269
    %271 = vdwg.mxu0
    %v272 = vmax.f32 %v197, 0.0
    %v273 = vmax.f32 %v199, 0.0
    %v274 = vmax.f32 %v268, 0.0
    %v275 = vmax.f32 %v270, 0.0
    %v276 = vld [vmem:[#allocation8] sm:$0xff]
    %v277 = vld [vmem:[#allocation8 + $0x8] sm:$0xff]
    %v278 = vld [vmem:[#allocation8 + $0x10] sm:$0xff]
    %v279 = vld [vmem:[#allocation8 + $0x18] sm:$0xff]
    %v280 = vld [vmem:[#allocation8 + $0x20] sm:$0xff]
    %v281 = vld [vmem:[#allocation8 + $0x28] sm:$0xff]
    %v282 = vld [vmem:[#allocation8 + $0x30] sm:$0xff]
    %v283 = vld [vmem:[#allocation8 + $0x38] sm:$0xff]
    %v284 = vld [vmem:[#allocation8 + $0x40] sm:$0xff]
    %v285 = vld [vmem:[#allocation8 + $0x48] sm:$0xff]
    %v286 = vld [vmem:[#allocation8 + $0x50] sm:$0xff]
    %v287 = vld [vmem:[#allocation8 + $0x58] sm:$0xff]
    %v288 = vld [vmem:[#allocation8 + $0x60] sm:$0xff]
    %v289 = vld [vmem:[#allocation8 + $0x68] sm:$0xff]
    %v290 = vld [vmem:[#allocation8 + $0x70] sm:$0xff]
    %v291 = vld [vmem:[#allocation8 + $0x78] sm:$0xff]
    %v292 = vld [vmem:[#allocation8 + $0x80] sm:$0xff]
    %v293 = vld [vmem:[#allocation8 + $0x88] sm:$0xff]
    %v294 = vld [vmem:[#allocation8 + $0x90] sm:$0xff]
    %v295 = vld [vmem:[#allocation8 + $0x98] sm:$0xff]
    %v296 = vld [vmem:[#allocation8 + $0xa0] sm:$0xff]
    %v297 = vld [vmem:[#allocation8 + $0xa8] sm:$0xff]
    %v298 = vld [vmem:[#allocation8 + $0xb0] sm:$0xff]
    %v299 = vld [vmem:[#allocation8 + $0xb8] sm:$0xff]
    %v300 = vld [vmem:[#allocation8 + $0xc0] sm:$0xff]
    %v301 = vld [vmem:[#allocation8 + $0xc8] sm:$0xff]
    %v302 = vld [vmem:[#allocation8 + $0xd0] sm:$0xff]
    %v303 = vld [vmem:[#allocation8 + $0xd8] sm:$0xff]
    %v304 = vld [vmem:[#allocation8 + $0xe0] sm:$0xff]
    %v305 = vld [vmem:[#allocation8 + $0xe8] sm:$0xff]
    %v306 = vld [vmem:[#allocation8 + $0xf0] sm:$0xff]
    %v307 = vld [vmem:[#allocation8 + $0xf8] sm:$0xff]
    %v308 = vld [vmem:[#allocation8 + $0x100] sm:$0xff]
    %v309 = vld [vmem:[#allocation8 + $0x108] sm:$0xff]
    %v310 = vld [vmem:[#allocation8 + $0x110] sm:$0xff]
    %v311 = vld [vmem:[#allocation8 + $0x118] sm:$0xff]
    %v312 = vld [vmem:[#allocation8 + $0x120] sm:$0xff]
    %v313 = vld [vmem:[#allocation8 + $0x128] sm:$0xff]
    %v314 = vld [vmem:[#allocation8 + $0x130] sm:$0xff]
    %v315 = vld [vmem:[#allocation8 + $0x138] sm:$0xff]
    %v316 = vld [vmem:[#allocation8 + $0x140] sm:$0xff]
    %v317 = vld [vmem:[#allocation8 + $0x148] sm:$0xff]
    %v318 = vld [vmem:[#allocation8 + $0x150] sm:$0xff]
    %v319 = vld [vmem:[#allocation8 + $0x158] sm:$0xff]
    %v320 = vld [vmem:[#allocation8 + $0x160] sm:$0xff]
    %v321 = vld [vmem:[#allocation8 + $0x168] sm:$0xff]
    %v322 = vld [vmem:[#allocation8 + $0x170] sm:$0xff]
    %v323 = vld [vmem:[#allocation8 + $0x178] sm:$0xff]
    %v324 = vld [vmem:[#allocation8 + $0x180] sm:$0xff]
    %v325 = vld [vmem:[#allocation8 + $0x188] sm:$0xff]
    %v326 = vld [vmem:[#allocation8 + $0x190] sm:$0xff]
    %v327 = vld [vmem:[#allocation8 + $0x198] sm:$0xff]
    %v328 = vld [vmem:[#allocation8 + $0x1a0] sm:$0xff]
    %v329 = vld [vmem:[#allocation8 + $0x1a8] sm:$0xff]
    %v330 = vld [vmem:[#allocation8 + $0x1b0] sm:$0xff]
    %v331 = vld [vmem:[#allocation8 + $0x1b8] sm:$0xff]
    %v332 = vld [vmem:[#allocation8 + $0x1c0] sm:$0xff]
    %v333 = vld [vmem:[#allocation8 + $0x1c8] sm:$0xff]
    %v334 = vld [vmem:[#allocation8 + $0x1d0] sm:$0xff]
    %v335 = vld [vmem:[#allocation8 + $0x1d8] sm:$0xff]
    %v336 = vld [vmem:[#allocation8 + $0x1e0] sm:$0xff]
    %v337 = vld [vmem:[#allocation8 + $0x1e8] sm:$0xff]
    %v338 = vld [vmem:[#allocation8 + $0x1f0] sm:$0xff]
    %v339 = vld [vmem:[#allocation8 + $0x1f8] sm:$0xff]
    %v340 = vld [vmem:[#allocation8 + $0x200] sm:$0xff]
    %v341 = vld [vmem:[#allocation8 + $0x208] sm:$0xff]
    %v342 = vld [vmem:[#allocation8 + $0x210] sm:$0xff]
    %v343 = vld [vmem:[#allocation8 + $0x218] sm:$0xff]
    %v344 = vld [vmem:[#allocation8 + $0x220] sm:$0xff]
    %v345 = vld [vmem:[#allocation8 + $0x228] sm:$0xff]
    %v346 = vld [vmem:[#allocation8 + $0x230] sm:$0xff]
    %v347 = vld [vmem:[#allocation8 + $0x238] sm:$0xff]
    %v348 = vld [vmem:[#allocation8 + $0x240] sm:$0xff]
    %v349 = vld [vmem:[#allocation8 + $0x248] sm:$0xff]
    %v350 = vld [vmem:[#allocation8 + $0x250] sm:$0xff]
    %v351 = vld [vmem:[#allocation8 + $0x258] sm:$0xff]
    %v352 = vld [vmem:[#allocation8 + $0x260] sm:$0xff]
    %v353 = vld [vmem:[#allocation8 + $0x268] sm:$0xff]
    %v354 = vld [vmem:[#allocation8 + $0x270] sm:$0xff]
    %v355 = vld [vmem:[#allocation8 + $0x278] sm:$0xff]
    %v356 = vld [vmem:[#allocation8 + $0x280] sm:$0xff]
    %v357 = vld [vmem:[#allocation8 + $0x288] sm:$0xff]
    %v358 = vld [vmem:[#allocation8 + $0x290] sm:$0xff]
    %v359 = vld [vmem:[#allocation8 + $0x298] sm:$0xff]
    %v360 = vld [vmem:[#allocation8 + $0x2a0] sm:$0xff]
    %v361 = vld [vmem:[#allocation8 + $0x2a8] sm:$0xff]
    %v362 = vld [vmem:[#allocation8 + $0x2b0] sm:$0xff]
    %v363 = vld [vmem:[#allocation8 + $0x2b8] sm:$0xff]
    %v364 = vld [vmem:[#allocation8 + $0x2c0] sm:$0xff]
    %v365 = vld [vmem:[#allocation8 + $0x2c8] sm:$0xff]
    %v366 = vld [vmem:[#allocation8 + $0x2d0] sm:$0xff]
    %v367 = vld [vmem:[#allocation8 + $0x2d8] sm:$0xff]
    %v368 = vld [vmem:[#allocation8 + $0x2e0] sm:$0xff]
    %v369 = vld [vmem:[#allocation8 + $0x2e8] sm:$0xff]
    %v370 = vld [vmem:[#allocation8 + $0x2f0] sm:$0xff]
    %v371 = vld [vmem:[#allocation8 + $0x2f8] sm:$0xff]
    %v372 = vld [vmem:[#allocation8 + $0x300] sm:$0xff]
    %v373 = vld [vmem:[#allocation8 + $0x308] sm:$0xff]
    %v374 = vld [vmem:[#allocation8 + $0x310] sm:$0xff]
    %v375 = vld [vmem:[#allocation8 + $0x318] sm:$0xff]
    %v376 = vld [vmem:[#allocation8 + $0x320] sm:$0xff]
    %v377 = vld [vmem:[#allocation8 + $0x328] sm:$0xff]
    %v378 = vld [vmem:[#allocation8 + $0x330] sm:$0xff]
    %v379 = vld [vmem:[#allocation8 + $0x338] sm:$0xff]
    %v380 = vld [vmem:[#allocation8 + $0x340] sm:$0xff]
    %v381 = vld [vmem:[#allocation8 + $0x348] sm:$0xff]
    %v382 = vld [vmem:[#allocation8 + $0x350] sm:$0xff]
    %v383 = vld [vmem:[#allocation8 + $0x358] sm:$0xff]
    %v384 = vld [vmem:[#allocation8 + $0x360] sm:$0xff]
    %v385 = vld [vmem:[#allocation8 + $0x368] sm:$0xff]
    %v386 = vld [vmem:[#allocation8 + $0x370] sm:$0xff]
    %v387 = vld [vmem:[#allocation8 + $0x378] sm:$0xff]
    %v388 = vld [vmem:[#allocation8 + $0x380] sm:$0xff]
    %v389 = vld [vmem:[#allocation8 + $0x388] sm:$0xff]
    %v390 = vld [vmem:[#allocation8 + $0x390] sm:$0xff]
    %v391 = vld [vmem:[#allocation8 + $0x398] sm:$0xff]
    %v392 = vld [vmem:[#allocation8 + $0x3a0] sm:$0xff]
    %v393 = vld [vmem:[#allocation8 + $0x3a8] sm:$0xff]
    %v394 = vld [vmem:[#allocation8 + $0x3b0] sm:$0xff]
    %v395 = vld [vmem:[#allocation8 + $0x3b8] sm:$0xff]
    %v396 = vld [vmem:[#allocation8 + $0x3c0] sm:$0xff]
    %v397 = vld [vmem:[#allocation8 + $0x3c8] sm:$0xff]
    %v398 = vld [vmem:[#allocation8 + $0x3d0] sm:$0xff]
    %v399 = vld [vmem:[#allocation8 + $0x3d8] sm:$0xff]
    %v400 = vld [vmem:[#allocation8 + $0x3e0] sm:$0xff]
    %v401 = vld [vmem:[#allocation8 + $0x3e8] sm:$0xff]
    %v402 = vld [vmem:[#allocation8 + $0x3f0] sm:$0xff]
    %v403 = vld [vmem:[#allocation8 + $0x3f8] sm:$0xff]
    %v404 = vld [vmem:[#allocation8 + $0x400] sm:$0xff]
    %v405 = vld [vmem:[#allocation8 + $0x408] sm:$0xff]
    %v406 = vld [vmem:[#allocation8 + $0x410] sm:$0xff]
    %v407 = vld [vmem:[#allocation8 + $0x418] sm:$0xff]
    %v408 = vld [vmem:[#allocation8 + $0x420] sm:$0xff]
    %v409 = vld [vmem:[#allocation8 + $0x428] sm:$0xff]
    %v410 = vld [vmem:[#allocation8 + $0x430] sm:$0xff]
    %v411 = vld [vmem:[#allocation8 + $0x438] sm:$0xff]
    %v412 = vld [vmem:[#allocation8 + $0x440] sm:$0xff]
    %v413 = vld [vmem:[#allocation8 + $0x448] sm:$0xff]
    %v414 = vld [vmem:[#allocation8 + $0x450] sm:$0xff]
    %v415 = vld [vmem:[#allocation8 + $0x458] sm:$0xff]
    %v416 = vld [vmem:[#allocation8 + $0x460] sm:$0xff]
    %v417 = vld [vmem:[#allocation8 + $0x468] sm:$0xff]
    %v418 = vld [vmem:[#allocation8 + $0x470] sm:$0xff]
    %v419 = vld [vmem:[#allocation8 + $0x478] sm:$0xff]
    %v420 = vld [vmem:[#allocation8 + $0x480] sm:$0xff]
    %v421 = vld [vmem:[#allocation8 + $0x488] sm:$0xff]
    %v422 = vld [vmem:[#allocation8 + $0x490] sm:$0xff]
    %v423 = vld [vmem:[#allocation8 + $0x498] sm:$0xff]
    %v424 = vld [vmem:[#allocation8 + $0x4a0] sm:$0xff]
    %v425 = vld [vmem:[#allocation8 + $0x4a8] sm:$0xff]
    %v426 = vld [vmem:[#allocation8 + $0x4b0] sm:$0xff]
    %v427 = vld [vmem:[#allocation8 + $0x4b8] sm:$0xff]
    %v428 = vld [vmem:[#allocation8 + $0x4c0] sm:$0xff]
    %v429 = vld [vmem:[#allocation8 + $0x4c8] sm:$0xff]
    %v430 = vld [vmem:[#allocation8 + $0x4d0] sm:$0xff]
    %v431 = vld [vmem:[#allocation8 + $0x4d8] sm:$0xff]
    %v432 = vld [vmem:[#allocation8 + $0x4e0] sm:$0xff]
    %v433 = vld [vmem:[#allocation8 + $0x4e8] sm:$0xff]
    %v434 = vld [vmem:[#allocation8 + $0x4f0] sm:$0xff]
    %v435 = vld [vmem:[#allocation8 + $0x4f8] sm:$0xff]
    %v436 = vld [vmem:[#allocation8 + $0x500] sm:$0xff]
    %v437 = vld [vmem:[#allocation8 + $0x508] sm:$0xff]
    %v438 = vld [vmem:[#allocation8 + $0x510] sm:$0xff]
    %v439 = vld [vmem:[#allocation8 + $0x518] sm:$0xff]
    %v440 = vld [vmem:[#allocation8 + $0x520] sm:$0xff]
    %v441 = vld [vmem:[#allocation8 + $0x528] sm:$0xff]
    %v442 = vld [vmem:[#allocation8 + $0x530] sm:$0xff]
    %v443 = vld [vmem:[#allocation8 + $0x538] sm:$0xff]
    %v444 = vld [vmem:[#allocation8 + $0x540] sm:$0xff]
    %v445 = vld [vmem:[#allocation8 + $0x548] sm:$0xff]
    %v446 = vld [vmem:[#allocation8 + $0x550] sm:$0xff]
    %v447 = vld [vmem:[#allocation8 + $0x558] sm:$0xff]
    %v448 = vld [vmem:[#allocation8 + $0x560] sm:$0xff]
    %v449 = vld [vmem:[#allocation8 + $0x568] sm:$0xff]
    %v450 = vld [vmem:[#allocation8 + $0x570] sm:$0xff]
    %v451 = vld [vmem:[#allocation8 + $0x578] sm:$0xff]
    %v452 = vld [vmem:[#allocation8 + $0x580] sm:$0xff]
    %v453 = vld [vmem:[#allocation8 + $0x588] sm:$0xff]
    %v454 = vld [vmem:[#allocation8 + $0x590] sm:$0xff]
    %v455 = vld [vmem:[#allocation8 + $0x598] sm:$0xff]
    %v456 = vld [vmem:[#allocation8 + $0x5a0] sm:$0xff]
    %v457 = vld [vmem:[#allocation8 + $0x5a8] sm:$0xff]
    %v458 = vld [vmem:[#allocation8 + $0x5b0] sm:$0xff]
    %v459 = vld [vmem:[#allocation8 + $0x5b8] sm:$0xff]
    %v460 = vld [vmem:[#allocation8 + $0x5c0] sm:$0xff]
    %v461 = vld [vmem:[#allocation8 + $0x5c8] sm:$0xff]
    %v462 = vld [vmem:[#allocation8 + $0x5d0] sm:$0xff]
    %v463 = vld [vmem:[#allocation8 + $0x5d8] sm:$0xff]
    %v464 = vld [vmem:[#allocation8 + $0x5e0] sm:$0xff]
    %v465 = vld [vmem:[#allocation8 + $0x5e8] sm:$0xff]
    %v466 = vld [vmem:[#allocation8 + $0x5f0] sm:$0xff]
    %v467 = vld [vmem:[#allocation8 + $0x5f8] sm:$0xff]
    %v468 = vld [vmem:[%s4] sm:$0x7]
    %v470 = vlaneseq
    %v471 = vshrl.u32 %v470, 7
    %v472 = vsub.s32 0, %v471
    %v473 = vrot.slane %v468, %v472
    %v474 = vlaneseq
    %v475 = vshrl.u32 %v474, 7
    %v476 = vsub.s32 1, %v475
    %v477 = vrot.slane %v468, %v476
    %v478 = vlaneseq
    %v479 = vshrl.u32 %v478, 7
    %v480 = vsub.s32 2, %v479
    %v481 = vrot.slane %v468, %v480
    %485 = vmatprep.subr.mxu0 %v322
    %486 = vmatpush1.msra.mxu0 %v321
    %487 = vmatprep.subr.mxu0 %v319
    %488 = vmatpush1.msra.mxu0 %v318
    %489 = vmatprep.subr.mxu0 %v316
    %490 = vmatpush1.msra.mxu0 %v315
    %491 = vmatprep.subr.mxu0 %v313
    %492 = vmatpush1.msra.mxu0 %v312
    %493 = vmatprep.subr.mxu0 %v310
    %494 = vmatpush1.msra.mxu0 %v309
    %495 = vmatprep.subr.mxu0 %v307
    %496 = vmatpush1.msra.mxu0 %v306
    %497 = vmatprep.subr.mxu0 %v304
    %498 = vmatpush1.msra.mxu0 %v303
    %499 = vmatprep.subr.mxu0 %v301
    %500 = vmatpush1.msra.mxu0 %v300
    %501 = vmatprep.subr.mxu0 %v298
    %502 = vmatpush1.msra.mxu0 %v297
    %503 = vmatprep.subr.mxu0 %v295
    %504 = vmatpush1.msra.mxu0 %v294
    %505 = vmatprep.subr.mxu0 %v292
    %506 = vmatpush1.msra.mxu0 %v291
    %507 = vmatprep.subr.mxu0 %v289
    %508 = vmatpush1.msra.mxu0 %v288
    %509 = vmatprep.subr.mxu0 %v286
    %510 = vmatpush1.msra.mxu0 %v285
    %511 = vmatprep.subr.mxu0 %v283
    %512 = vmatpush1.msra.mxu0 %v282
    %513 = vmatprep.subr.mxu0 %v280
    %514 = vmatpush1.msra.mxu0 %v279
    %515 = vmatprep.subr.mxu0 %v277
    %516 = vmatpush1.msra.mxu0 %v276
    %517 = vmatprep.subr.mxu0 %v370
    %518 = vmatpush2.msra.mxu0 %v369
    %519 = vmatprep.subr.mxu0 %v367
    %520 = vmatpush2.msra.mxu0 %v366
    %521 = vmatprep.subr.mxu0 %v364
    %522 = vmatpush2.msra.mxu0 %v363
    %523 = vmatprep.subr.mxu0 %v361
    %524 = vmatpush2.msra.mxu0 %v360
    %525 = vmatprep.subr.mxu0 %v358
    %526 = vmatpush2.msra.mxu0 %v357
    %527 = vmatprep.subr.mxu0 %v355
    %528 = vmatpush2.msra.mxu0 %v354
    %529 = vmatprep.subr.mxu0 %v352
    %530 = vmatpush2.msra.mxu0 %v351
    %531 = vmatprep.subr.mxu0 %v349
    %532 = vmatpush2.msra.mxu0 %v348
    %533 = vmatprep.subr.mxu0 %v346
    %534 = vmatpush2.msra.mxu0 %v345
    %535 = vmatprep.subr.mxu0 %v343
    %536 = vmatpush2.msra.mxu0 %v342
    %537 = vmatprep.subr.mxu0 %v340
    %538 = vmatpush2.msra.mxu0 %v339
    %539 = vmatprep.subr.mxu0 %v337
    %540 = vmatpush2.msra.mxu0 %v336
    %541 = vmatprep.subr.mxu0 %v334
    %542 = vmatpush2.msra.mxu0 %v333
    %543 = vmatprep.subr.mxu0 %v331
    %544 = vmatpush2.msra.mxu0 %v330
    %545 = vmatprep.subr.mxu0 %v328
    %546 = vmatpush2.msra.mxu0 %v327
    %547 = vmatprep.subr.mxu0 %v325
    %548 = vmatpush2.msra.mxu0 %v324
    %549 = vmatprep.mubr.f32.mxu0 %v273
    %550 = vmatmul.mubr.f32.gmra.mxu0 %v272
    %v551 = vpop.f32.mrf.mxu0
    %v552 = vadd.f32 %v473, %v551
    %v553 = vpop.f32.mrf.mxu0
    %v554 = vadd.f32 %v477, %v553
    %555 = vdwg.mxu0
    %556 = vmatprep.subr.mxu0 %v418
    %557 = vmatpush1.msra.mxu0 %v417
    %558 = vmatprep.subr.mxu0 %v415
    %559 = vmatpush1.msra.mxu0 %v414
    %560 = vmatprep.subr.mxu0 %v412
    %561 = vmatpush1.msra.mxu0 %v411
    %562 = vmatprep.subr.mxu0 %v409
    %563 = vmatpush1.msra.mxu0 %v408
    %564 = vmatprep.subr.mxu0 %v406
    %565 = vmatpush1.msra.mxu0 %v405
    %566 = vmatprep.subr.mxu0 %v403
    %567 = vmatpush1.msra.mxu0 %v402
    %568 = vmatprep.subr.mxu0 %v400
    %569 = vmatpush1.msra.mxu0 %v399
    %570 = vmatprep.subr.mxu0 %v397
    %571 = vmatpush1.msra.mxu0 %v396
    %572 = vmatprep.subr.mxu0 %v394
    %573 = vmatpush1.msra.mxu0 %v393
    %574 = vmatprep.subr.mxu0 %v391
    %575 = vmatpush1.msra.mxu0 %v390
    %576 = vmatprep.subr.mxu0 %v388
    %577 = vmatpush1.msra.mxu0 %v387
    %578 = vmatprep.subr.mxu0 %v385
    %579 = vmatpush1.msra.mxu0 %v384
    %580 = vmatprep.subr.mxu0 %v382
    %581 = vmatpush1.msra.mxu0 %v381
    %582 = vmatprep.subr.mxu0 %v379
    %583 = vmatpush1.msra.mxu0 %v378
    %584 = vmatprep.subr.mxu0 %v376
    %585 = vmatpush1.msra.mxu0 %v375
    %586 = vmatprep.subr.mxu0 %v373
    %587 = vmatpush1.msra.mxu0 %v372
    %588 = vmatprep.subr.mxu0 %v466
    %589 = vmatpush2.msra.mxu0 %v465
    %590 = vmatprep.subr.mxu0 %v463
    %591 = vmatpush2.msra.mxu0 %v462
    %592 = vmatprep.subr.mxu0 %v460
    %593 = vmatpush2.msra.mxu0 %v459
    %594 = vmatprep.subr.mxu0 %v457
    %595 = vmatpush2.msra.mxu0 %v456
    %596 = vmatprep.subr.mxu0 %v454
    %597 = vmatpush2.msra.mxu0 %v453
    %598 = vmatprep.subr.mxu0 %v451
    %599 = vmatpush2.msra.mxu0 %v450
    %600 = vmatprep.subr.mxu0 %v448
    %601 = vmatpush2.msra.mxu0 %v447
    %602 = vmatprep.subr.mxu0 %v445
    %603 = vmatpush2.msra.mxu0 %v444
    %604 = vmatprep.subr.mxu0 %v442
    %605 = vmatpush2.msra.mxu0 %v441
    %606 = vmatprep.subr.mxu0 %v439
    %607 = vmatpush2.msra.mxu0 %v438
    %608 = vmatprep.subr.mxu0 %v436
    %609 = vmatpush2.msra.mxu0 %v435
    %610 = vmatprep.subr.mxu0 %v433
    %611 = vmatpush2.msra.mxu0 %v432
    %612 = vmatprep.subr.mxu0 %v430
    %613 = vmatpush2.msra.mxu0 %v429
    %614 = vmatprep.subr.mxu0 %v427
    %615 = vmatpush2.msra.mxu0 %v426
    %616 = vmatprep.subr.mxu0 %v424
    %617 = vmatpush2.msra.mxu0 %v423
    %618 = vmatprep.subr.mxu0 %v421
    %619 = vmatpush2.msra.mxu0 %v420
    %620 = vmatprep.mubr.f32.mxu0 %v275
    %621 = vmatmul.mubr.f32.gmra.mxu0 %v274
    %v622 = vpop.f32.mrf.mxu0
    %v623 = vadd.f32 %v552, %v622
    %v624 = vpop.f32.mrf.mxu0
    %v625 = vadd.f32 %v554, %v624
    %626 = vdwg.mxu0
    %627 = vmatprep.subr.mxu0 0.0
    %628 = vmatpush1.msra.mxu0 %v323
    %629 = vmatprep.subr.mxu0 0.0
    %630 = vmatpush1.msra.mxu0 %v320
    %631 = vmatprep.subr.mxu0 0.0
    %632 = vmatpush1.msra.mxu0 %v317
    %633 = vmatprep.subr.mxu0 0.0
    %634 = vmatpush1.msra.mxu0 %v314
    %635 = vmatprep.subr.mxu0 0.0
    %636 = vmatpush1.msra.mxu0 %v311
    %637 = vmatprep.subr.mxu0 0.0
    %638 = vmatpush1.msra.mxu0 %v308
    %639 = vmatprep.subr.mxu0 0.0
    %640 = vmatpush1.msra.mxu0 %v305
    %641 = vmatprep.subr.mxu0 0.0
    %642 = vmatpush1.msra.mxu0 %v302
    %643 = vmatprep.subr.mxu0 0.0
    %644 = vmatpush1.msra.mxu0 %v299
    %645 = vmatprep.subr.mxu0 0.0
    %646 = vmatpush1.msra.mxu0 %v296
    %647 = vmatprep.subr.mxu0 0.0
    %648 = vmatpush1.msra.mxu0 %v293
    %649 = vmatprep.subr.mxu0 0.0
    %650 = vmatpush1.msra.mxu0 %v290
    %651 = vmatprep.subr.mxu0 0.0
    %652 = vmatpush1.msra.mxu0 %v287
    %653 = vmatprep.subr.mxu0 0.0
    %654 = vmatpush1.msra.mxu0 %v284
    %655 = vmatprep.subr.mxu0 0.0
    %656 = vmatpush1.msra.mxu0 %v281
    %657 = vmatprep.subr.mxu0 0.0
    %658 = vmatpush1.msra.mxu0 %v278
    %659 = vmatprep.subr.mxu0 0.0
    %660 = vmatpush2.msra.mxu0 %v371
    %661 = vmatprep.subr.mxu0 0.0
    %662 = vmatpush2.msra.mxu0 %v368
    %663 = vmatprep.subr.mxu0 0.0
    %664 = vmatpush2.msra.mxu0 %v365
    %665 = vmatprep.subr.mxu0 0.0
    %666 = vmatpush2.msra.mxu0 %v362
    %667 = vmatprep.subr.mxu0 0.0
    %668 = vmatpush2.msra.mxu0 %v359
    %669 = vmatprep.subr.mxu0 0.0
    %670 = vmatpush2.msra.mxu0 %v356
    %671 = vmatprep.subr.mxu0 0.0
    %672 = vmatpush2.msra.mxu0 %v353
    %673 = vmatprep.subr.mxu0 0.0
    %674 = vmatpush2.msra.mxu0 %v350
    %675 = vmatprep.subr.mxu0 0.0
    %676 = vmatpush2.msra.mxu0 %v347
    %677 = vmatprep.subr.mxu0 0.0
    %678 = vmatpush2.msra.mxu0 %v344
    %679 = vmatprep.subr.mxu0 0.0
    %680 = vmatpush2.msra.mxu0 %v341
    %681 = vmatprep.subr.mxu0 0.0
    %682 = vmatpush2.msra.mxu0 %v338
    %683 = vmatprep.subr.mxu0 0.0
    %684 = vmatpush2.msra.mxu0 %v335
    %685 = vmatprep.subr.mxu0 0.0
    %686 = vmatpush2.msra.mxu0 %v332
    %687 = vmatprep.subr.mxu0 0.0
    %688 = vmatpush2.msra.mxu0 %v329
    %689 = vmatprep.subr.mxu0 0.0
    %690 = vmatpush2.msra.mxu0 %v326
    %691 = vmatprep.mubr.f32.mxu0 %v273
    %692 = vmatmul.mubr.f32.gmra.mxu0 %v272
    %v693 = vpop.f32.mrf.mxu0
    %v694 = vadd.f32 %v481, %v693
    %v695 = vpop.f32.mrf.mxu0
    %696 = vdwg.mxu0
    %697 = vmatprep.subr.mxu0 0.0
    %698 = vmatpush1.msra.mxu0 %v419
    %699 = vmatprep.subr.mxu0 0.0
    %700 = vmatpush1.msra.mxu0 %v416
    %701 = vmatprep.subr.mxu0 0.0
    %702 = vmatpush1.msra.mxu0 %v413
    %703 = vmatprep.subr.mxu0 0.0
    %704 = vmatpush1.msra.mxu0 %v410
    %705 = vmatprep.subr.mxu0 0.0
    %706 = vmatpush1.msra.mxu0 %v407
    %707 = vmatprep.subr.mxu0 0.0
    %708 = vmatpush1.msra.mxu0 %v404
    %709 = vmatprep.subr.mxu0 0.0
    %710 = vmatpush1.msra.mxu0 %v401
    %711 = vmatprep.subr.mxu0 0.0
    %712 = vmatpush1.msra.mxu0 %v398
    %713 = vmatprep.subr.mxu0 0.0
    %714 = vmatpush1.msra.mxu0 %v395
    %715 = vmatprep.subr.mxu0 0.0
    %716 = vmatpush1.msra.mxu0 %v392
    %717 = vmatprep.subr.mxu0 0.0
    %718 = vmatpush1.msra.mxu0 %v389
    %719 = vmatprep.subr.mxu0 0.0
    %720 = vmatpush1.msra.mxu0 %v386
    %721 = vmatprep.subr.mxu0 0.0
    %722 = vmatpush1.msra.mxu0 %v383
    %723 = vmatprep.subr.mxu0 0.0
    %724 = vmatpush1.msra.mxu0 %v380
    %725 = vmatprep.subr.mxu0 0.0
    %726 = vmatpush1.msra.mxu0 %v377
    %727 = vmatprep.subr.mxu0 0.0
    %728 = vmatpush1.msra.mxu0 %v374
    %729 = vmatprep.subr.mxu0 0.0
    %730 = vmatpush2.msra.mxu0 %v467
    %731 = vmatprep.subr.mxu0 0.0
    %732 = vmatpush2.msra.mxu0 %v464
    %733 = vmatprep.subr.mxu0 0.0
    %734 = vmatpush2.msra.mxu0 %v461
    %735 = vmatprep.subr.mxu0 0.0
    %736 = vmatpush2.msra.mxu0 %v458
    %737 = vmatprep.subr.mxu0 0.0
    %738 = vmatpush2.msra.mxu0 %v455
    %739 = vmatprep.subr.mxu0 0.0
    %740 = vmatpush2.msra.mxu0 %v452
    %741 = vmatprep.subr.mxu0 0.0
    %742 = vmatpush2.msra.mxu0 %v449
    %743 = vmatprep.subr.mxu0 0.0
    %744 = vmatpush2.msra.mxu0 %v446
    %745 = vmatprep.subr.mxu0 0.0
    %746 = vmatpush2.msra.mxu0 %v443
    %747 = vmatprep.subr.mxu0 0.0
    %748 = vmatpush2.msra.mxu0 %v440
    %749 = vmatprep.subr.mxu0 0.0
    %750 = vmatpush2.msra.mxu0 %v437
    %751 = vmatprep.subr.mxu0 0.0
    %752 = vmatpush2.msra.mxu0 %v434
    %753 = vmatprep.subr.mxu0 0.0
    %754 = vmatpush2.msra.mxu0 %v431
    %755 = vmatprep.subr.mxu0 0.0
    %756 = vmatpush2.msra.mxu0 %v428
    %757 = vmatprep.subr.mxu0 0.0
    %758 = vmatpush2.msra.mxu0 %v425
    %759 = vmatprep.subr.mxu0 0.0
    %760 = vmatpush2.msra.mxu0 %v422
    %761 = vmatprep.mubr.f32.mxu0 %v275
    %762 = vmatmul.mubr.f32.gmra.mxu0 %v274
    %v763 = vpop.f32.mrf.mxu0
    %v764 = vadd.f32 %v694, %v763
    %v765 = vpop.f32.mrf.mxu0
    %766 = vdwg.mxu0
    %v767 = vmax.f32 %v623, 0.0
    %v768 = vmax.f32 %v625, 0.0
    %v769 = vmax.f32 %v764, 0.0
    %v770 = vld [vmem:[#allocation10] sm:$0xff]
    %v771 = vld [vmem:[#allocation10 + $0x8] sm:$0xff]
    %v772 = vld [vmem:[#allocation10 + $0x10] sm:$0xff]
    %v773 = vld [vmem:[#allocation10 + $0x18] sm:$0xff]
    %v774 = vld [vmem:[#allocation10 + $0x20] sm:$0xff]
    %v775 = vld [vmem:[#allocation10 + $0x28] sm:$0xff]
    %v776 = vld [vmem:[#allocation10 + $0x30] sm:$0xff]
    %v777 = vld [vmem:[#allocation10 + $0x38] sm:$0xff]
    %v778 = vld [vmem:[#allocation10 + $0x40] sm:$0xff]
    %v779 = vld [vmem:[#allocation10 + $0x48] sm:$0xff]
    %v780 = vld [vmem:[#allocation10 + $0x50] sm:$0xff]
    %v781 = vld [vmem:[#allocation10 + $0x58] sm:$0xff]
    %v782 = vld [vmem:[#allocation10 + $0x60] sm:$0xff]
    %v783 = vld [vmem:[#allocation10 + $0x68] sm:$0xff]
    %v784 = vld [vmem:[#allocation10 + $0x70] sm:$0xff]
    %v785 = vld [vmem:[#allocation10 + $0x78] sm:$0xff]
    %v786 = vld [vmem:[#allocation10 + $0x80] sm:$0xff]
    %v787 = vld [vmem:[#allocation10 + $0x88] sm:$0xff]
    %v788 = vld [vmem:[#allocation10 + $0x90] sm:$0xff]
    %v789 = vld [vmem:[#allocation10 + $0x98] sm:$0xff]
    %v790 = vld [vmem:[#allocation10 + $0xa0] sm:$0xff]
    %v791 = vld [vmem:[#allocation10 + $0xa8] sm:$0xff]
    %v792 = vld [vmem:[#allocation10 + $0xb0] sm:$0xff]
    %v793 = vld [vmem:[#allocation10 + $0xb8] sm:$0xff]
    %v794 = vld [vmem:[#allocation10 + $0xc0] sm:$0xff]
    %v795 = vld [vmem:[#allocation10 + $0xc8] sm:$0xff]
    %v796 = vld [vmem:[#allocation10 + $0xd0] sm:$0xff]
    %v797 = vld [vmem:[#allocation10 + $0xd8] sm:$0xff]
    %v798 = vld [vmem:[#allocation10 + $0xe0] sm:$0xff]
    %v799 = vld [vmem:[#allocation10 + $0xe8] sm:$0xff]
    %v800 = vld [vmem:[#allocation10 + $0xf0] sm:$0xff]
    %v801 = vld [vmem:[#allocation10 + $0xf8] sm:$0xff]
    %v802 = vld [vmem:[#allocation10 + $0x100] sm:$0xff]
    %v803 = vld [vmem:[#allocation10 + $0x108] sm:$0xff]
    %v804 = vld [vmem:[#allocation10 + $0x110] sm:$0xff]
    %v805 = vld [vmem:[#allocation10 + $0x118] sm:$0xff]
    %v806 = vld [vmem:[#allocation10 + $0x120] sm:$0xff]
    %v807 = vld [vmem:[#allocation10 + $0x128] sm:$0xff]
    %v808 = vld [vmem:[#allocation10 + $0x130] sm:$0xff]
    %v809 = vld [vmem:[#allocation10 + $0x138] sm:$0xff]
    %v810 = vld [vmem:[#allocation10 + $0x140] sm:$0xff]
    %v811 = vld [vmem:[#allocation10 + $0x148] sm:$0xff]
    %v812 = vld [vmem:[#allocation10 + $0x150] sm:$0xff]
    %v813 = vld [vmem:[#allocation10 + $0x158] sm:$0xff]
    %v814 = vld [vmem:[#allocation10 + $0x160] sm:$0xff]
    %v815 = vld [vmem:[#allocation10 + $0x168] sm:$0xff]
    %v816 = vld [vmem:[#allocation10 + $0x170] sm:$0xff]
    %v817 = vld [vmem:[#allocation10 + $0x178] sm:$0xff]
    %v818 = vld [vmem:[%s6] sm:$0x1]
    %v820 = vlaneseq
    %v821 = vshrl.u32 %v820, 7
    %v822 = vsub.s32 0, %v821
    %v823 = vrot.slane %v818, %v822
    %825 = vmatprep.subr.mxu0 0.0
    %826 = vmatpush1.msra.mxu0 %v785
    %827 = vmatprep.subr.mxu0 0.0
    %828 = vmatpush1.msra.mxu0 %v784
    %829 = vmatprep.subr.mxu0 0.0
    %830 = vmatpush1.msra.mxu0 %v783
    %831 = vmatprep.subr.mxu0 0.0
    %832 = vmatpush1.msra.mxu0 %v782
    %833 = vmatprep.subr.mxu0 0.0
    %834 = vmatpush1.msra.mxu0 %v781
    %835 = vmatprep.subr.mxu0 0.0
    %836 = vmatpush1.msra.mxu0 %v780
    %837 = vmatprep.subr.mxu0 0.0
    %838 = vmatpush1.msra.mxu0 %v779
    %839 = vmatprep.subr.mxu0 0.0
    %840 = vmatpush1.msra.mxu0 %v778
    %841 = vmatprep.subr.mxu0 0.0
    %842 = vmatpush1.msra.mxu0 %v777
    %843 = vmatprep.subr.mxu0 0.0
    %844 = vmatpush1.msra.mxu0 %v776
    %845 = vmatprep.subr.mxu0 0.0
    %846 = vmatpush1.msra.mxu0 %v775
    %847 = vmatprep.subr.mxu0 0.0
    %848 = vmatpush1.msra.mxu0 %v774
    %849 = vmatprep.subr.mxu0 0.0
    %850 = vmatpush1.msra.mxu0 %v773
    %851 = vmatprep.subr.mxu0 0.0
    %852 = vmatpush1.msra.mxu0 %v772
    %853 = vmatprep.subr.mxu0 0.0
    %854 = vmatpush1.msra.mxu0 %v771
    %855 = vmatprep.subr.mxu0 0.0
    %856 = vmatpush1.msra.mxu0 %v770
    %857 = vmatprep.subr.mxu0 0.0
    %858 = vmatpush2.msra.mxu0 %v801
    %859 = vmatprep.subr.mxu0 0.0
    %860 = vmatpush2.msra.mxu0 %v800
    %861 = vmatprep.subr.mxu0 0.0
    %862 = vmatpush2.msra.mxu0 %v799
    %863 = vmatprep.subr.mxu0 0.0
    %864 = vmatpush2.msra.mxu0 %v798
    %865 = vmatprep.subr.mxu0 0.0
    %866 = vmatpush2.msra.mxu0 %v797
    %867 = vmatprep.subr.mxu0 0.0
    %868 = vmatpush2.msra.mxu0 %v796
    %869 = vmatprep.subr.mxu0 0.0
    %870 = vmatpush2.msra.mxu0 %v795
    %871 = vmatprep.subr.mxu0 0.0
    %872 = vmatpush2.msra.mxu0 %v794
    %873 = vmatprep.subr.mxu0 0.0
    %874 = vmatpush2.msra.mxu0 %v793
    %875 = vmatprep.subr.mxu0 0.0
    %876 = vmatpush2.msra.mxu0 %v792
    %877 = vmatprep.subr.mxu0 0.0
    %878 = vmatpush2.msra.mxu0 %v791
    %879 = vmatprep.subr.mxu0 0.0
    %880 = vmatpush2.msra.mxu0 %v790
    %881 = vmatprep.subr.mxu0 0.0
    %882 = vmatpush2.msra.mxu0 %v789
    %883 = vmatprep.subr.mxu0 0.0
    %884 = vmatpush2.msra.mxu0 %v788
    %885 = vmatprep.subr.mxu0 0.0
    %886 = vmatpush2.msra.mxu0 %v787
    %887 = vmatprep.subr.mxu0 0.0
    %888 = vmatpush2.msra.mxu0 %v786
    %889 = vmatprep.mubr.f32.mxu0 %v768
    %890 = vmatmul.mubr.f32.gmra.mxu0 %v767
    %v891 = vpop.f32.mrf.mxu0
    %v892 = vadd.f32 %v823, %v891
    %v893 = vpop.f32.mrf.mxu0
    %894 = vdwg.mxu0
    %895 = vmatprep.subr.mxu0 0.0
    %896 = vmatpush1.msra.mxu0 %v817
    %897 = vmatprep.subr.mxu0 0.0
    %898 = vmatpush1.msra.mxu0 %v816
    %899 = vmatprep.subr.mxu0 0.0
    %900 = vmatpush1.msra.mxu0 %v815
    %901 = vmatprep.subr.mxu0 0.0
    %902 = vmatpush1.msra.mxu0 %v814
    %903 = vmatprep.subr.mxu0 0.0
    %904 = vmatpush1.msra.mxu0 %v813
    %905 = vmatprep.subr.mxu0 0.0
    %906 = vmatpush1.msra.mxu0 %v812
    %907 = vmatprep.subr.mxu0 0.0
    %908 = vmatpush1.msra.mxu0 %v811
    %909 = vmatprep.subr.mxu0 0.0
    %910 = vmatpush1.msra.mxu0 %v810
    %911 = vmatprep.subr.mxu0 0.0
    %912 = vmatpush1.msra.mxu0 %v809
    %913 = vmatprep.subr.mxu0 0.0
    %914 = vmatpush1.msra.mxu0 %v808
    %915 = vmatprep.subr.mxu0 0.0
    %916 = vmatpush1.msra.mxu0 %v807
    %917 = vmatprep.subr.mxu0 0.0
    %918 = vmatpush1.msra.mxu0 %v806
    %919 = vmatprep.subr.mxu0 0.0
    %920 = vmatpush1.msra.mxu0 %v805
    %921 = vmatprep.subr.mxu0 0.0
    %922 = vmatpush1.msra.mxu0 %v804
    %923 = vmatprep.subr.mxu0 0.0
    %924 = vmatpush1.msra.mxu0 %v803
    %925 = vmatprep.subr.mxu0 0.0
    %926 = vmatpush1.msra.mxu0 %v802
    %927 = vmatprep.subr.mxu0 0.0
    %928 = vmatpush2.msra.mxu0 0.0
    %929 = vmatprep.subr.mxu0 0.0
    %930 = vmatpush2.msra.mxu0 0.0
    %931 = vmatprep.subr.mxu0 0.0
    %932 = vmatpush2.msra.mxu0 0.0
    %933 = vmatprep.subr.mxu0 0.0
    %934 = vmatpush2.msra.mxu0 0.0
    %935 = vmatprep.subr.mxu0 0.0
    %936 = vmatpush2.msra.mxu0 0.0
    %937 = vmatprep.subr.mxu0 0.0
    %938 = vmatpush2.msra.mxu0 0.0
    %939 = vmatprep.subr.mxu0 0.0
    %940 = vmatpush2.msra.mxu0 0.0
    %941 = vmatprep.subr.mxu0 0.0
    %942 = vmatpush2.msra.mxu0 0.0
    %943 = vmatprep.subr.mxu0 0.0
    %944 = vmatpush2.msra.mxu0 0.0
    %945 = vmatprep.subr.mxu0 0.0
    %946 = vmatpush2.msra.mxu0 0.0
    %947 = vmatprep.subr.mxu0 0.0
    %948 = vmatpush2.msra.mxu0 0.0
    %949 = vmatprep.subr.mxu0 0.0
    %950 = vmatpush2.msra.mxu0 0.0
    %951 = vmatprep.subr.mxu0 0.0
    %952 = vmatpush2.msra.mxu0 0.0
    %953 = vmatprep.subr.mxu0 0.0
    %954 = vmatpush2.msra.mxu0 0.0
    %955 = vmatprep.subr.mxu0 0.0
    %956 = vmatpush2.msra.mxu0 0.0
    %957 = vmatprep.subr.mxu0 0.0
    %958 = vmatpush2.msra.mxu0 0.0
    %959 = vmatprep.mubr.f32.mxu0 0.0
    %960 = vmatmul.mubr.f32.gmra.mxu0 %v769
    %v961 = vpop.f32.mrf.mxu0
    %v962 = vadd.f32 %v892, %v961
    %v963 = vpop.f32.mrf.mxu0
    %964 = vdwg.mxu0
    %v965 = vtanh.pop %v962
    %966 = vst [vmem:[#allocation11] sm:$0xff] %v965
    // Predicated region
    $region50: #{tpu_custom_call.1} parent=1 // pred_check
      _
    $region51: #{tpu_custom_call.1} parent=1 // pred_check_branch
      %968 = sbr.rel (0) target = $region53
    $region52: #{tpu_custom_call.1} parent=1 // pred_region
      %s970 = ssub.s32 128, 128
      %971 = vsyncadd [#allocation4], %s970
      %s973 = sshll.u32 [#allocation11], 4
      %s974 = int_to_ptr.vmem [resolvable:$true] %s973
      %976 = dma.vmem_to_hbm [thread:$0]  %s974, 128, %s7, [#allocation4]
    $region53: #{tpu_custom_call.1} parent=1 // pred_fallthru
      _
    // Predicated region
    $region54: #{tpu_custom_call.1} parent=1 // pred_check
      _
    $region55: #{tpu_custom_call.1} parent=1 // pred_check_branch
      %978 = sbr.rel (0) target = $region57
    $region56: #{tpu_custom_call.1} parent=1 // pred_region
      %979 = dma.done [#allocation4], 128
    $region57: #{tpu_custom_call.1} parent=1 // pred_fallthru
      _
    %980 = vsyncpa [#allocation3], 1
    %981 = vsyncpa [#allocation6], 1
    %982 = vsyncpa [#allocation9], 1
    %983 = vsyncpa [#allocation4], 1

</llo_original>
